<compile_context>
chip_gen: v6e
topology: v6e:2x2x1
jax: 0.10.0
libtpu: 0.0.40
codegen_flags: <defaults>
</compile_context>

<pallas_src>
import functools
import math

import jax
import jax.numpy as jnp
from jax.experimental import pallas as pl
from jax.experimental.pallas import tpu as pltpu


COMPUTE_DTYPE = jnp.bfloat16   # MXU input dtype; accumulation stays f32
NEG_INF = -1e30                # finite "minus infinity" (avoids inf-inf NaNs)


# --------------------------- tiling configuration ---------------------------

def _tpu_config():
    """Generation-dependent tile preferences and scoped-VMEM limit."""
    kind = ""
    try:
        kind = jax.devices()[0].device_kind.lower()
    except Exception:
        pass
    if "v5" in kind or "v6" in kind:
        # 128 MiB VMEM parts: larger blocks amortize per-grid-step overhead
        # and cut the number of weight re-streams.
        return {"vmem": 100 * 1024 * 1024, "tm_proj": 256, "tn_proj": 512,
                "tm_ffn": 256, "tf_ffn": 512, "t_attn": 512}
    # v7x (64 MiB / TC) and unknown devices: stay conservative.
    return {"vmem": 48 * 1024 * 1024, "tm_proj": 256, "tn_proj": 512,
            "tm_ffn": 128, "tf_ffn": 256, "t_attn": 256}


_CFG = _tpu_config()


def _fit(full, pref, align):
    """Largest tile <= pref that divides `full` and is a multiple of `align`;
    falls back to a single full-extent block."""
    if full <= pref:
        return full
    t = (pref // align) * align
    while t >= align:
        if full % t == 0:
            return t
        t -= align
    # TODO(synk): pad-to-tile (cdiv grid + masked tail) for dims with no
    # aligned divisor instead of falling back to one full-extent block.
    return full


def _cparams(semantics):
    return pltpu.CompilerParams(
        dimension_semantics=semantics,
        vmem_limit_bytes=_CFG["vmem"],
    )


def _rot_half(x):
    # split-half "rotate_half": [re, im] -> [-im, re]  (last axis)
    h = x.shape[-1] // 2
    return jnp.concatenate([-x[..., h:], x[..., :h]], axis=-1)


# ----------------------------- Pallas kernels -------------------------------

def _rmsnorm_matmul_bias_kernel(x_ref, w_ref, b_ref, nw_ref, o_ref, xn_ref,
                                *, eps):
    # Fused RMSNorm + matmul + bias.  The normalized rows are computed once per
    # row tile (n == 0) and cached in a bf16 VMEM scratch for all N tiles.
    @pl.when(pl.program_id(1) == 0)
    def _():
        x = x_ref[...].astype(jnp.float32)                     # (tm, D)
        ms = jnp.mean(x * x, axis=-1, keepdims=True)
        xn = x * jax.lax.rsqrt(ms + eps) * nw_ref[...]
        xn_ref[...] = xn.astype(xn_ref.dtype)

    acc = jnp.dot(xn_ref[...], w_ref[...],                     # bf16 x bf16
                  preferred_element_type=jnp.float32)
    o_ref[...] = (acc + b_ref[...]).astype(o_ref.dtype)


def rmsnorm_linear_bias(x, w, b, norm_w, eps, out_dtype):
    # x: (M, D) f32, w: (D, N) bf16, b: (1, N) f32, norm_w: (1, D) f32
    M, D = x.shape
    N = w.shape[1]
    tm = _fit(M, _CFG["tm_proj"], 8)
    tn = _fit(N, _CFG["tn_proj"], 128)
    return pl.pallas_call(
        functools.partial(_rmsnorm_matmul_bias_kernel, eps=eps),
        grid=(M // tm, N // tn),
        in_specs=[
            pl.BlockSpec((tm, D), lambda m, n: (m, 0)),
            pl.BlockSpec((D, tn), lambda m, n: (0, n)),
            pl.BlockSpec((1, tn), lambda m, n: (0, n)),
            pl.BlockSpec((1, D), lambda m, n: (0, 0)),
        ],
        out_specs=pl.BlockSpec((tm, tn), lambda m, n: (m, n)),
        out_shape=jax.ShapeDtypeStruct((M, N), out_dtype),
        scratch_shapes=[pltpu.VMEM((tm, D), COMPUTE_DTYPE)],
        compiler_params=_cparams(("parallel", "arbitrary")),
    )(x, w, b, norm_w)


def _matmul_residual_kernel(a_ref, w_ref, r_ref, o_ref):
    acc = jnp.dot(a_ref[...], w_ref[...], preferred_element_type=jnp.float32)
    o_ref[...] = (r_ref[...].astype(jnp.float32) + acc).astype(o_ref.dtype)


def linear_residual(a, w, residual):
    # out = residual + a @ w ;  a: (M, K) bf16, w: (K, N) bf16, residual f32
    M, K = a.shape
    N = w.shape[1]
    tm = _fit(M, _CFG["tm_proj"], 8)
    tn = _fit(N, _CFG["tn_proj"], 128)
    return pl.pallas_call(
        _matmul_residual_kernel,
        grid=(M // tm, N // tn),
        in_specs=[
            pl.BlockSpec((tm, K), lambda m, n: (m, 0)),
            pl.BlockSpec((K, tn), lambda m, n: (0, n)),
            pl.BlockSpec((tm, tn), lambda m, n: (m, n)),
        ],
        out_specs=pl.BlockSpec((tm, tn), lambda m, n: (m, n)),
        out_shape=jax.ShapeDtypeStruct((M, N), residual.dtype),
        compiler_params=_cparams(("parallel", "parallel")),
    )(a, w, residual)


def _flash_attn_kernel(q_ref, k_ref, v_ref, cq_ref, sq_ref, ck_ref, sk_ref,
                       o_ref, qs_ref, m_ref, l_ref, acc_ref,
                       *, scale, tq, tkv, n_rep, head_dim):
    iq = pl.program_id(2)
    ik = pl.program_id(3)
    rows = n_rep * tq

    @pl.when(ik == 0)
    def _():
        # RoPE + 1/sqrt(Dh) scale on the query block, computed once per q tile
        # (all n_rep heads) and cached in bf16 VMEM for every kv step.
        q = q_ref[0].astype(jnp.float32)                       # (n_rep, tq, Dh)
        cq = cq_ref[...][None]                                  # (1, tq, Dh)
        sq = sq_ref[...][None]
        q = (q * cq + _rot_half(q) * sq) * scale
        qs_ref[...] = q.reshape(rows, head_dim).astype(qs_ref.dtype)
        m_ref[...] = jnp.full((rows, 1), NEG_INF, jnp.float32)
        l_ref[...] = jnp.zeros((rows, 1), jnp.float32)
        acc_ref[...] = jnp.zeros((rows, head_dim), jnp.float32)

    def step(masked):
        def body():
            # RoPE on the key block (f32 math, bf16 MXU input).
            k = k_ref[0, 0].astype(jnp.float32)                 # (tkv, Dh)
            k = (k * ck_ref[...] + _rot_half(k) * sk_ref[...]).astype(COMPUTE_DTYPE)
            v = v_ref[0, 0]                                     # (tkv, Dh) bf16
            s = jax.lax.dot_general(                            # (rows, tkv)
                qs_ref[...], k, (((1,), (1,)), ((), ())),
                preferred_element_type=jnp.float32)
            if masked:
                qpos = iq * tq + (
                    jax.lax.broadcasted_iota(jnp.int32, (rows, tkv), 0) % tq)
                kpos = ik * tkv + jax.lax.broadcasted_iota(
                    jnp.int32, (rows, tkv), 1)
                s = jnp.where(kpos <= qpos, s, NEG_INF)
            m_prev = m_ref[...]
            m_new = jnp.maximum(m_prev, jnp.max(s, axis=-1, keepdims=True))
            alpha = jnp.exp(m_prev - m_new)
            p = jnp.exp(s - m_new)                              # f32 softmax
            l_ref[...] = alpha * l_ref[...] + jnp.sum(p, axis=-1, keepdims=True)
            acc_ref[...] = alpha * acc_ref[...] + jnp.dot(
                p.astype(COMPUTE_DTYPE), v, preferred_element_type=jnp.float32)
            m_ref[...] = m_new
        return body

    # Interior blocks (fully visible) skip the mask; only the diagonal block
    # is masked.  Blocks with ik > iq are skipped entirely (and their DMA is
    # clamped away by the index_map).
    pl.when(ik < iq)(step(masked=False))
    pl.when(ik == iq)(step(masked=True))

    @pl.when(ik == pl.num_programs(3) - 1)
    def _():
        out = acc_ref[...] / l_ref[...]                         # exact divide
        o_ref[0] = out.reshape(n_rep, tq, head_dim).astype(o_ref.dtype)


def flash_attention(q, k, v, rope_cos, rope_sin, n_rep):
    # q: (B, H, S, Dh) bf16, k/v: (B, Hkv, S, Dh) bf16; rope_cos/sin: (S, Dh) f32.
    B, H, S, Dh = q.shape
    Hkv = k.shape[1]
    scale = 1.0 / math.sqrt(Dh)
    t = _fit(S, _CFG["t_attn"], 8)                # same tile for q and kv blocks
    n_blk = S // t

    def q_map(b, h, iq, ik):
        return (b, h, iq, 0)

    def kv_map(b, h, iq, ik):
        # Causal DMA clamp: masked-out kv blocks re-reference the last needed
        # block instead of fetching a new one.
        return (b, h, jnp.minimum(ik, iq), 0)

    def rope_q_map(b, h, iq, ik):
        return (iq, 0)

    def rope_k_map(b, h, iq, ik):
        return (jnp.minimum(ik, iq), 0)

    return pl.pallas_call(
        functools.partial(_flash_attn_kernel, scale=scale, tq=t, tkv=t,
                          n_rep=n_rep, head_dim=Dh),
        grid=(B, Hkv, n_blk, n_blk),
        in_specs=[
            pl.BlockSpec((1, n_rep, t, Dh), q_map),     # n_rep q heads / kv head
            pl.BlockSpec((1, 1, t, Dh), kv_map),
            pl.BlockSpec((1, 1, t, Dh), kv_map),
            pl.BlockSpec((t, Dh), rope_q_map),          # cos for q positions
            pl.BlockSpec((t, Dh), rope_q_map),          # sin for q positions
            pl.BlockSpec((t, Dh), rope_k_map),          # cos for k positions
            pl.BlockSpec((t, Dh), rope_k_map),          # sin for k positions
        ],
        out_specs=pl.BlockSpec((1, n_rep, t, Dh), q_map),
        out_shape=jax.ShapeDtypeStruct((B, H, S, Dh), q.dtype),
        scratch_shapes=[
            pltpu.VMEM((n_rep * t, Dh), COMPUTE_DTYPE),  # RoPE'd + scaled q
            pltpu.VMEM((n_rep * t, 1), jnp.float32),     # running max m
            pltpu.VMEM((n_rep * t, 1), jnp.float32),     # running denom l
            pltpu.VMEM((n_rep * t, Dh), jnp.float32),    # running accumulator
        ],
        compiler_params=_cparams(
            ("parallel", "parallel", "parallel", "arbitrary")),
    )(q, k, v, rope_cos, rope_sin, rope_cos, rope_sin)


def _ffn_kernel(x_ref, w1_ref, w3_ref, w2_ref, nw_ref, o_ref, xn_ref, acc_ref,
                *, eps):
    f = pl.program_id(1)

    @pl.when(f == 0)
    def _():
        # RMSNorm computed once per row tile, cached in VMEM (bf16) and reused
        # across all intermediate-axis steps.
        x = x_ref[...].astype(jnp.float32)
        ms = jnp.mean(x * x, axis=-1, keepdims=True)
        xn = x * jax.lax.rsqrt(ms + eps) * nw_ref[...]
        xn_ref[...] = xn.astype(xn_ref.dtype)
        acc_ref[...] = jnp.zeros(acc_ref.shape, acc_ref.dtype)

    xn = xn_ref[...]                                            # (tm, D) bf16
    h1 = jnp.dot(xn, w1_ref[...], preferred_element_type=jnp.float32)
    h3 = jnp.dot(xn, w3_ref[...], preferred_element_type=jnp.float32)
    g = (h1 * jax.nn.sigmoid(h1)) * h3                          # SwiGLU, f32
    acc_ref[...] += jnp.dot(g.astype(COMPUTE_DTYPE), w2_ref[...],
                            preferred_element_type=jnp.float32)

    @pl.when(f == pl.num_programs(1) - 1)
    def _():
        # Fused residual add: out = h + FFN(rmsnorm(h)); x_ref holds h.
        o_ref[...] = (x_ref[...].astype(jnp.float32) + acc_ref[...]).astype(o_ref.dtype)


def ffn_block(h, w1, w3, w2, norm_w, eps):
    # h: (M, D) f32; w1/w3: (D, F) bf16; w2: (F, D) bf16; norm_w: (1, D) f32
    M, D = h.shape
    F = w1.shape[1]
    tm = _fit(M, _CFG["tm_ffn"], 8)
    tf = _fit(F, _CFG["tf_ffn"], 128)
    return pl.pallas_call(
        functools.partial(_ffn_kernel, eps=eps),
        grid=(M // tm, F // tf),
        in_specs=[
            pl.BlockSpec((tm, D), lambda m, f: (m, 0)),
            pl.BlockSpec((D, tf), lambda m, f: (0, f)),
            pl.BlockSpec((D, tf), lambda m, f: (0, f)),
            pl.BlockSpec((tf, D), lambda m, f: (f, 0)),
            pl.BlockSpec((1, D), lambda m, f: (0, 0)),
        ],
        out_specs=pl.BlockSpec((tm, D), lambda m, f: (m, 0)),
        out_shape=jax.ShapeDtypeStruct((M, D), h.dtype),
        scratch_shapes=[
            pltpu.VMEM((tm, D), COMPUTE_DTYPE),   # cached normalized x
            pltpu.VMEM((tm, D), jnp.float32),     # w2 accumulator
        ],
        compiler_params=_cparams(("parallel", "arbitrary")),
    )(h, w1, w3, w2, norm_w)


# ----------------------------- JAX glue --------------------------------------

def precompute_rope(head_dim, seqlen, theta):
    # Split-half ("rotate_half") form, matching the de-interleaved wq/wk
    # columns: cos/sin of shape (S, Dh) = concat over the two halves.
    freqs = 1.0 / (theta ** (jnp.arange(0, head_dim, 2, dtype=jnp.float32) / head_dim))
    t = jnp.arange(seqlen, dtype=jnp.float32)
    angles = jnp.outer(t, freqs)                              # (S, Dh/2)
    cos = jnp.cos(angles)
    sin = jnp.sin(angles)
    return (jnp.concatenate([cos, cos], axis=-1),
            jnp.concatenate([sin, sin], axis=-1))


def _permute_rope_cols(w, n_heads, head_dim):
    # Reorder each head's output columns so interleaved RoPE pairs (2j, 2j+1)
    # become split halves (j, j + Dh/2).  Exact re-parameterization: the head
    # dim is contracted in q.k, so attention scores/outputs are unchanged.
    perm = jnp.concatenate([jnp.arange(0, head_dim, 2),
                            jnp.arange(1, head_dim, 2)])
    cols = (jnp.arange(n_heads)[:, None] * head_dim + perm[None, :]).reshape(-1)
    return jnp.take(w, cols, axis=-1)


def transformer_block_forward(x, rope_cos, rope_sin, params, *, n_heads,
                              n_kv_heads, eps=1e-5):
    B, S, D = x.shape
    head_dim = D // n_heads
    n_rep = n_heads // n_kv_heads
    M = B * S
    x2d = x.reshape(M, D)

    # ---- attention sub-block: fused RMSNorm + QKV projection (+bias) ----
    qkv = rmsnorm_linear_bias(x2d, params["wqkv"], params["bqkv"],
                              params["attn_norm_w"], eps,
                              out_dtype=COMPUTE_DTYPE)          # bf16
    nq = n_heads * head_dim
    nkv = n_kv_heads * head_dim
    # TODO(synk): the qkv slicing + head transposes below are single XLA copies
    # (bf16); they could be removed entirely by writing head-major outputs
    # straight from the QKV kernel's out_specs.
    q = jnp.transpose(qkv[:, :nq].reshape(B, S, n_heads, head_dim), (0, 2, 1, 3))
    k = jnp.transpose(qkv[:, nq:nq + nkv].reshape(B, S, n_kv_heads, head_dim),
                      (0, 2, 1, 3))
    v = jnp.transpose(qkv[:, nq + nkv:].reshape(B, S, n_kv_heads, head_dim),
                      (0, 2, 1, 3))

    # causal flash attention with fused RoPE + GQA KV reuse
    attn = flash_attention(q, k, v, rope_cos, rope_sin, n_rep)  # (B,H,S,Dh) bf16
    attn2d = jnp.transpose(attn, (0, 2, 1, 3)).reshape(M, D)

    # output projection with the first residual add fused into the epilogue
    h2d = linear_residual(attn2d, params["wo"], x2d)            # f32

    # ---- feed-forward sub-block: fused RMSNorm + SwiGLU + residual add ----
    out2d = ffn_block(h2d, params["w1"], params["w3"], params["w2"],
                      params["ffn_norm_w"], eps)
    return out2d.reshape(B, S, D)


# ----------------------------- setup / main -----------------------------------

def init_params(key, dim, n_heads, n_kv_heads, intermediate_size, layer_id):
    head_dim = dim // n_heads
    init_std = 0.02 / (2 * (layer_id + 1)) ** 0.5
    ks = jax.random.split(key, 8)
    wq = 0.02 * jax.random.normal(ks[0], (dim, n_heads * head_dim), jnp.float32)
    wk = 0.02 * jax.random.normal(ks[1], (dim, n_kv_heads * head_dim), jnp.float32)
    wv = 0.02 * jax.random.normal(ks[2], (dim, n_kv_heads * head_dim), jnp.float32)
    bq = jnp.zeros((n_heads * head_dim,), jnp.float32)
    bk = jnp.zeros((n_kv_heads * head_dim,), jnp.float32)
    bv = jnp.zeros((n_kv_heads * head_dim,), jnp.float32)

    # De-interleave RoPE pair columns of wq/wk (+biases) -> rotate_half form.
    wq = _permute_rope_cols(wq, n_heads, head_dim)
    wk = _permute_rope_cols(wk, n_kv_heads, head_dim)
    bq = _permute_rope_cols(bq, n_heads, head_dim)
    bk = _permute_rope_cols(bk, n_kv_heads, head_dim)

    p = {
        # norms (nn.RMSNorm resets to ones)
        "attn_norm_w": jnp.ones((1, dim), jnp.float32),
        "ffn_norm_w": jnp.ones((1, dim), jnp.float32),
        # fused QKV projection, stored bf16 (in, out); torch Linear is (out, in)
        "wqkv": jnp.concatenate([wq, wk, wv], axis=1).astype(COMPUTE_DTYPE),
        "bqkv": jnp.concatenate([bq, bk, bv])[None, :],            # f32
        "wo": (init_std * jax.random.normal(
            ks[3], (n_heads * head_dim, dim), jnp.float32)).astype(COMPUTE_DTYPE),
        # feed-forward (bf16 weights, f32 accumulation in-kernel)
        "w1": (0.02 * jax.random.normal(
            ks[4], (dim, intermediate_size), jnp.float32)).astype(COMPUTE_DTYPE),
        "w3": (init_std * jax.random.normal(
            ks[5], (dim, intermediate_size), jnp.float32)).astype(COMPUTE_DTYPE),
        "w2": (init_std * jax.random.normal(
            ks[6], (intermediate_size, dim), jnp.float32)).astype(COMPUTE_DTYPE),
    }
    return p


if __name__ == "__main__":
    # Small, consistent shapes: batch=2, seq=8, dim=32, 4 heads (GQA: 2 kv
    # heads), head_dim=8, intermediate=64.
    B, S, D = 2, 8, 32
    N_HEADS, N_KV_HEADS = 4, 2
    INTERMEDIATE = 64
    ROPE_THETA = 1_000_000.0
    LAYER_ID = 0

    key = jax.random.PRNGKey(0)
    k_x, k_p = jax.random.split(key)
    x = jax.random.normal(k_x, (B, S, D), jnp.float32)
    params = init_params(k_p, D, N_HEADS, N_KV_HEADS, INTERMEDIATE, LAYER_ID)
    rope_cos, rope_sin = precompute_rope(D // N_HEADS, S, ROPE_THETA)

    fwd = jax.jit(
        functools.partial(
            transformer_block_forward, n_heads=N_HEADS, n_kv_heads=N_KV_HEADS
        )
    )
    out = fwd(x, rope_cos, rope_sin, params)
    jax.block_until_ready(out)
    assert out.shape == (B, S, D) and out.dtype == jnp.float32
    print("KERNEL_OK")
</pallas_src>

<mosaic_0001>
module attributes {stable_mosaic.version = 11 : i64} {
  func.func @_rmsnorm_matmul_bias_kernel(%arg0: i32, %arg1: i32, %arg2: memref<16x32xf32, #tpu.memory_space<vmem>>, %arg3: memref<32x64xbf16, #tpu.memory_space<vmem>>, %arg4: memref<1x64xf32, #tpu.memory_space<vmem>>, %arg5: memref<1x32xf32, #tpu.memory_space<vmem>>, %arg6: memref<16x64xbf16, #tpu.memory_space<vmem>>, %arg7: memref<16x32xbf16, #tpu.memory_space<vmem>>) attributes {dimension_semantics = [#tpu.dimension_semantics<parallel>, #tpu.dimension_semantics<arbitrary>], iteration_bounds = array<i64: 1, 1>, scalar_prefetch = 0 : i64, scratch_operands = 1 : i64, tpu.core_type = #tpu.core_type<tc>, window_params = [{transform_indices = @transform_0, window_bounds = array<i64: 16, 32>}, {transform_indices = @transform_1, window_bounds = array<i64: 32, 64>}, {transform_indices = @transform_2, window_bounds = array<i64: 1, 64>}, {pipeline_mode = #tpu.pipeline_mode<synchronous>, transform_indices = @transform_3, window_bounds = array<i64: 1, 32>}, {transform_indices = @transform_4, window_bounds = array<i64: 16, 64>}]} {
    %c0_i32 = arith.constant 0 : i32
    %0 = arith.cmpi eq, %arg1, %c0_i32 : i32
    %1 = arith.extui %0 : i1 to i32
    %c0_i32_0 = arith.constant 0 : i32
    %2 = arith.cmpi ne, %1, %c0_i32_0 : i32
    scf.if %2 {
      %c0_8 = arith.constant 0 : index
      %c0_9 = arith.constant 0 : index
      %11 = vector.load %arg2[%c0_8, %c0_9] : memref<16x32xf32, #tpu.memory_space<vmem>>, vector<16x32xf32>
      %12 = arith.mulf %11, %11 : vector<16x32xf32>
      %cst_10 = arith.constant dense<0.000000e+00> : vector<16xf32>
      %13 = vector.multi_reduction <add>, %12, %cst_10 [1] : vector<16x32xf32> to vector<16xf32>
      %14 = vector.shape_cast %13 : vector<16xf32> to vector<16x1xf32>
      %cst_11 = arith.constant 3.200000e+01 : f32
      %15 = vector.broadcast %cst_11 : f32 to vector<16x1xf32>
      %16 = arith.divf %14, %15 : vector<16x1xf32>
      %cst_12 = arith.constant 9.99999974E-6 : f32
      %17 = vector.broadcast %cst_12 : f32 to vector<16x1xf32>
      %18 = arith.addf %16, %17 : vector<16x1xf32>
      %19 = math.rsqrt %18 : vector<16x1xf32>
      %20 = vector.broadcast %19 : vector<16x1xf32> to vector<16x32xf32>
      %21 = arith.mulf %11, %20 : vector<16x32xf32>
      %c0_13 = arith.constant 0 : index
      %c0_14 = arith.constant 0 : index
      %22 = vector.load %arg5[%c0_13, %c0_14] : memref<1x32xf32, #tpu.memory_space<vmem>>, vector<1x32xf32>
      %23 = vector.broadcast %22 : vector<1x32xf32> to vector<16x32xf32>
      %24 = arith.mulf %21, %23 : vector<16x32xf32>
      %25 = arith.truncf %24 : vector<16x32xf32> to vector<16x32xbf16>
      %c0_15 = arith.constant 0 : index
      %c0_16 = arith.constant 0 : index
      %26 = vector.load %arg7[%c0_15, %c0_16] : memref<16x32xbf16, #tpu.memory_space<vmem>>, vector<16x32xbf16>
      tpu.vector_store %arg7[%c0_15, %c0_16], %25 {strides = array<i32>} : memref<16x32xbf16, #tpu.memory_space<vmem>>, vector<16x32xbf16>,
    } else {
    }
    %c0 = arith.constant 0 : index
    %c0_1 = arith.constant 0 : index
    %3 = vector.load %arg7[%c0, %c0_1] : memref<16x32xbf16, #tpu.memory_space<vmem>>, vector<16x32xbf16>
    %c0_2 = arith.constant 0 : index
    %c0_3 = arith.constant 0 : index
    %4 = vector.load %arg3[%c0_2, %c0_3] : memref<32x64xbf16, #tpu.memory_space<vmem>>, vector<32x64xbf16>
    %cst = arith.constant dense<0.000000e+00> : vector<16x64xf32>
    %5 = tpu.matmul %3, %4, %cst {dimension_numbers = #tpu.dot_dimension_numbers<[1], [0], [0], [1], [0, 0, 1, 1], [], []>} : vector<16x32xbf16>, vector<32x64xbf16>, vector<16x64xf32> -> vector<16x64xf32>
    %c0_4 = arith.constant 0 : index
    %c0_5 = arith.constant 0 : index
    %6 = vector.load %arg4[%c0_4, %c0_5] : memref<1x64xf32, #tpu.memory_space<vmem>>, vector<1x64xf32>
    %7 = vector.broadcast %6 : vector<1x64xf32> to vector<16x64xf32>
    %8 = arith.addf %5, %7 : vector<16x64xf32>
    %9 = arith.truncf %8 : vector<16x64xf32> to vector<16x64xbf16>
    %c0_6 = arith.constant 0 : index
    %c0_7 = arith.constant 0 : index
    %10 = vector.load %arg6[%c0_6, %c0_7] : memref<16x64xbf16, #tpu.memory_space<vmem>>, vector<16x64xbf16>
    tpu.vector_store %arg6[%c0_6, %c0_7], %9 {strides = array<i32>} : memref<16x64xbf16, #tpu.memory_space<vmem>>, vector<16x64xbf16>,
    return
  }
  func.func @transform_0(%arg0: i32, %arg1: i32) -> (i32, i32) {
    %c0_i32 = arith.constant 0 : i32
    %c0_i32_0 = arith.constant 0 : i32
    return %arg0, %c0_i32 : i32, i32
  }
  func.func @transform_1(%arg0: i32, %arg1: i32) -> (i32, i32) {
    %c0_i32 = arith.constant 0 : i32
    %c0_i32_0 = arith.constant 0 : i32
    return %c0_i32, %arg1 : i32, i32
  }
  func.func @transform_2(%arg0: i32, %arg1: i32) -> (i32, i32) {
    %c0_i32 = arith.constant 0 : i32
    %c0_i32_0 = arith.constant 0 : i32
    return %c0_i32, %arg1 : i32, i32
  }
  func.func @transform_3(%arg0: i32, %arg1: i32) -> (i32, i32) {
    %c0_i32 = arith.constant 0 : i32
    %c0_i32_0 = arith.constant 0 : i32
    %c0_i32_1 = arith.constant 0 : i32
    return %c0_i32, %c0_i32_0 : i32, i32
  }
  func.func @transform_4(%arg0: i32, %arg1: i32) -> (i32, i32) {
    %c0_i32 = arith.constant 0 : i32
    return %arg0, %arg1 : i32, i32
  }
}

module attributes {stable_mosaic.version = 11 : i64} {
  func.func @_flash_attn_kernel(%arg0: i32, %arg1: i32, %arg2: i32, %arg3: i32, %arg4: memref<1x2x8x8xbf16, #tpu.memory_space<vmem>>, %arg5: memref<1x1x8x8xbf16, #tpu.memory_space<vmem>>, %arg6: memref<1x1x8x8xbf16, #tpu.memory_space<vmem>>, %arg7: memref<8x8xf32, #tpu.memory_space<vmem>>, %arg8: memref<8x8xf32, #tpu.memory_space<vmem>>, %arg9: memref<8x8xf32, #tpu.memory_space<vmem>>, %arg10: memref<8x8xf32, #tpu.memory_space<vmem>>, %arg11: memref<1x2x8x8xbf16, #tpu.memory_space<vmem>>, %arg12: memref<16x8xbf16, #tpu.memory_space<vmem>>, %arg13: memref<16x1xf32, #tpu.memory_space<vmem>>, %arg14: memref<16x1xf32, #tpu.memory_space<vmem>>, %arg15: memref<16x8xf32, #tpu.memory_space<vmem>>) attributes {dimension_semantics = [#tpu.dimension_semantics<parallel>, #tpu.dimension_semantics<parallel>, #tpu.dimension_semantics<parallel>, #tpu.dimension_semantics<arbitrary>], iteration_bounds = array<i64: 2, 2, 1, 1>, scalar_prefetch = 0 : i64, scratch_operands = 4 : i64, tpu.core_type = #tpu.core_type<tc>, window_params = [{transform_indices = @transform_0, window_bounds = array<i64: 1, 2, 8, 8>}, {transform_indices = @transform_1, window_bounds = array<i64: 1, 1, 8, 8>}, {transform_indices = @transform_2, window_bounds = array<i64: 1, 1, 8, 8>}, {transform_indices = @transform_3, window_bounds = array<i64: 8, 8>}, {transform_indices = @transform_4, window_bounds = array<i64: 8, 8>}, {transform_indices = @transform_5, window_bounds = array<i64: 8, 8>}, {transform_indices = @transform_6, window_bounds = array<i64: 8, 8>}, {transform_indices = @transform_7, window_bounds = array<i64: 1, 2, 8, 8>}]} {
    %c0_i32 = arith.constant 0 : i32
    %0 = arith.cmpi eq, %arg3, %c0_i32 : i32
    %1 = arith.extui %0 : i1 to i32
    %c0_i32_0 = arith.constant 0 : i32
    %2 = arith.cmpi ne, %1, %c0_i32_0 : i32
    scf.if %2 {
      %c0 = arith.constant 0 : index
      %c0_5 = arith.constant 0 : index
      %c0_6 = arith.constant 0 : index
      %c0_7 = arith.constant 0 : index
      %12 = vector.load %arg4[%c0, %c0_5, %c0_6, %c0_7] : memref<1x2x8x8xbf16, #tpu.memory_space<vmem>>, vector<1x2x8x8xbf16>
      %13 = vector.shape_cast %12 : vector<1x2x8x8xbf16> to vector<2x8x8xbf16>
      %14 = arith.extf %13 : vector<2x8x8xbf16> to vector<2x8x8xf32>
      %c0_8 = arith.constant 0 : index
      %c0_9 = arith.constant 0 : index
      %15 = vector.load %arg7[%c0_8, %c0_9] : memref<8x8xf32, #tpu.memory_space<vmem>>, vector<8x8xf32>
      %16 = vector.shape_cast %15 : vector<8x8xf32> to vector<1x8x8xf32>
      %c0_10 = arith.constant 0 : index
      %c0_11 = arith.constant 0 : index
      %17 = vector.load %arg8[%c0_10, %c0_11] : memref<8x8xf32, #tpu.memory_space<vmem>>, vector<8x8xf32>
      %18 = vector.shape_cast %17 : vector<8x8xf32> to vector<1x8x8xf32>
      %19 = vector.broadcast %16 : vector<1x8x8xf32> to vector<2x8x8xf32>
      %20 = arith.mulf %14, %19 : vector<2x8x8xf32>
      %21 = vector.extract_strided_slice %14 {offsets = [0, 0, 4], sizes = [2, 8, 4], strides = [1, 1, 1]} : vector<2x8x8xf32> to vector<2x8x4xf32>
      %cst = arith.constant 0.000000e+00 : f32
      %22 = vector.broadcast %cst : f32 to vector<2x8x4xf32>
      %23 = arith.subf %22, %21 : vector<2x8x4xf32>
      %24 = vector.extract_strided_slice %14 {offsets = [0, 0, 0], sizes = [2, 8, 4], strides = [1, 1, 1]} : vector<2x8x8xf32> to vector<2x8x4xf32>
      %25 = tpu.concatenate %23, %24 in 2 : vector<2x8x4xf32>, vector<2x8x4xf32> -> vector<2x8x8xf32>
      %26 = vector.broadcast %18 : vector<1x8x8xf32> to vector<2x8x8xf32>
      %27 = arith.mulf %25, %26 : vector<2x8x8xf32>
      %28 = arith.addf %20, %27 : vector<2x8x8xf32>
      %cst_12 = arith.constant 0.353553385 : f32
      %29 = vector.broadcast %cst_12 : f32 to vector<2x8x8xf32>
      %30 = arith.mulf %28, %29 : vector<2x8x8xf32>
      %31 = vector.shape_cast %30 : vector<2x8x8xf32> to vector<16x8xf32>
      %32 = arith.truncf %31 : vector<16x8xf32> to vector<16x8xbf16>
      %c0_13 = arith.constant 0 : index
      %c0_14 = arith.constant 0 : index
      %33 = vector.load %arg12[%c0_13, %c0_14] : memref<16x8xbf16, #tpu.memory_space<vmem>>, vector<16x8xbf16>
      tpu.vector_store %arg12[%c0_13, %c0_14], %32 {strides = array<i32>} : memref<16x8xbf16, #tpu.memory_space<vmem>>, vector<16x8xbf16>,
      %cst_15 = arith.constant -1.000000e+30 : f32
      %34 = vector.broadcast %cst_15 : f32 to vector<16x1xf32>
      %c0_16 = arith.constant 0 : index
      %c0_17 = arith.constant 0 : index
      %35 = vector.load %arg13[%c0_16, %c0_17] : memref<16x1xf32, #tpu.memory_space<vmem>>, vector<16x1xf32>
      tpu.vector_store %arg13[%c0_16, %c0_17], %34 {strides = array<i32>} : memref<16x1xf32, #tpu.memory_space<vmem>>, vector<16x1xf32>,
      %cst_18 = arith.constant 0.000000e+00 : f32
      %36 = vector.broadcast %cst_18 : f32 to vector<16x1xf32>
      %c0_19 = arith.constant 0 : index
      %c0_20 = arith.constant 0 : index
      %37 = vector.load %arg14[%c0_19, %c0_20] : memref<16x1xf32, #tpu.memory_space<vmem>>, vector<16x1xf32>
      tpu.vector_store %arg14[%c0_19, %c0_20], %36 {strides = array<i32>} : memref<16x1xf32, #tpu.memory_space<vmem>>, vector<16x1xf32>,
      %cst_21 = arith.constant 0.000000e+00 : f32
      %38 = vector.broadcast %cst_21 : f32 to vector<16x8xf32>
      %c0_22 = arith.constant 0 : index
      %c0_23 = arith.constant 0 : index
      %39 = vector.load %arg15[%c0_22, %c0_23] : memref<16x8xf32, #tpu.memory_space<vmem>>, vector<16x8xf32>
      tpu.vector_store %arg15[%c0_22, %c0_23], %38 {strides = array<i32>} : memref<16x8xf32, #tpu.memory_space<vmem>>, vector<16x8xf32>,
    } else {
    }
    %3 = arith.cmpi slt, %arg3, %arg2 : i32
    %4 = arith.extui %3 : i1 to i32
    %c0_i32_1 = arith.constant 0 : i32
    %5 = arith.cmpi ne, %4, %c0_i32_1 : i32
    scf.if %5 {
      %c0 = arith.constant 0 : index
      %c0_5 = arith.constant 0 : index
      %c0_6 = arith.constant 0 : index
      %c0_7 = arith.constant 0 : index
      %12 = vector.load %arg5[%c0, %c0_5, %c0_6, %c0_7] : memref<1x1x8x8xbf16, #tpu.memory_space<vmem>>, vector<1x1x8x8xbf16>
      %13 = vector.shape_cast %12 : vector<1x1x8x8xbf16> to vector<8x8xbf16>
      %14 = arith.extf %13 : vector<8x8xbf16> to vector<8x8xf32>
      %c0_8 = arith.constant 0 : index
      %c0_9 = arith.constant 0 : index
      %15 = vector.load %arg9[%c0_8, %c0_9] : memref<8x8xf32, #tpu.memory_space<vmem>>, vector<8x8xf32>
      %16 = arith.mulf %14, %15 : vector<8x8xf32>
      %17 = vector.extract_strided_slice %14 {offsets = [0, 4], sizes = [8, 4], strides = [1, 1]} : vector<8x8xf32> to vector<8x4xf32>
      %cst = arith.constant 0.000000e+00 : f32
      %18 = vector.broadcast %cst : f32 to vector<8x4xf32>
      %19 = arith.subf %18, %17 : vector<8x4xf32>
      %20 = vector.extract_strided_slice %14 {offsets = [0, 0], sizes = [8, 4], strides = [1, 1]} : vector<8x8xf32> to vector<8x4xf32>
      %21 = tpu.concatenate %19, %20 in 1 : vector<8x4xf32>, vector<8x4xf32> -> vector<8x8xf32>
      %c0_10 = arith.constant 0 : index
      %c0_11 = arith.constant 0 : index
      %22 = vector.load %arg10[%c0_10, %c0_11] : memref<8x8xf32, #tpu.memory_space<vmem>>, vector<8x8xf32>
      %23 = arith.mulf %21, %22 : vector<8x8xf32>
      %24 = arith.addf %16, %23 : vector<8x8xf32>
      %25 = arith.truncf %24 : vector<8x8xf32> to vector<8x8xbf16>
      %c0_12 = arith.constant 0 : index
      %c0_13 = arith.constant 0 : index
      %c0_14 = arith.constant 0 : index
      %c0_15 = arith.constant 0 : index
      %26 = vector.load %arg6[%c0_12, %c0_13, %c0_14, %c0_15] : memref<1x1x8x8xbf16, #tpu.memory_space<vmem>>, vector<1x1x8x8xbf16>
      %27 = vector.shape_cast %26 : vector<1x1x8x8xbf16> to vector<8x8xbf16>
      %c0_16 = arith.constant 0 : index
      %c0_17 = arith.constant 0 : index
      %28 = vector.load %arg12[%c0_16, %c0_17] : memref<16x8xbf16, #tpu.memory_space<vmem>>, vector<16x8xbf16>
      %cst_18 = arith.constant dense<0.000000e+00> : vector<16x8xf32>
      %29 = tpu.matmul %28, %25, %cst_18 {dimension_numbers = #tpu.dot_dimension_numbers<[1], [1], [0], [0], [0, 0, 1, 0], [], []>} : vector<16x8xbf16>, vector<8x8xbf16>, vector<16x8xf32> -> vector<16x8xf32>
      %c0_19 = arith.constant 0 : index
      %c0_20 = arith.constant 0 : index
      %30 = vector.load %arg13[%c0_19, %c0_20] : memref<16x1xf32, #tpu.memory_space<vmem>>, vector<16x1xf32>
      %cst_21 = arith.constant dense<0xFF800000> : vector<16xf32>
      %31 = vector.multi_reduction <maximumf>, %29, %cst_21 [1] : vector<16x8xf32> to vector<16xf32>
      %32 = vector.shape_cast %31 : vector<16xf32> to vector<16x1xf32>
      %33 = arith.maximumf %30, %32 : vector<16x1xf32>
      %34 = arith.subf %30, %33 : vector<16x1xf32>
      %35 = math.exp %34 : vector<16x1xf32>
      %36 = vector.broadcast %33 : vector<16x1xf32> to vector<16x8xf32>
      %37 = arith.subf %29, %36 : vector<16x8xf32>
      %38 = math.exp %37 : vector<16x8xf32>
      %c0_22 = arith.constant 0 : index
      %c0_23 = arith.constant 0 : index
      %39 = vector.load %arg14[%c0_22, %c0_23] : memref<16x1xf32, #tpu.memory_space<vmem>>, vector<16x1xf32>
      %40 = arith.mulf %35, %39 : vector<16x1xf32>
      %cst_24 = arith.constant dense<0.000000e+00> : vector<16xf32>
      %41 = vector.multi_reduction <add>, %38, %cst_24 [1] : vector<16x8xf32> to vector<16xf32>
      %42 = vector.shape_cast %41 : vector<16xf32> to vector<16x1xf32>
      %43 = arith.addf %40, %42 : vector<16x1xf32>
      %c0_25 = arith.constant 0 : index
      %c0_26 = arith.constant 0 : index
      %44 = vector.load %arg14[%c0_25, %c0_26] : memref<16x1xf32, #tpu.memory_space<vmem>>, vector<16x1xf32>
      tpu.vector_store %arg14[%c0_25, %c0_26], %43 {strides = array<i32>} : memref<16x1xf32, #tpu.memory_space<vmem>>, vector<16x1xf32>,
      %c0_27 = arith.constant 0 : index
      %c0_28 = arith.constant 0 : index
      %45 = vector.load %arg15[%c0_27, %c0_28] : memref<16x8xf32, #tpu.memory_space<vmem>>, vector<16x8xf32>
      %46 = vector.broadcast %35 : vector<16x1xf32> to vector<16x8xf32>
      %47 = arith.mulf %46, %45 : vector<16x8xf32>
      %48 = arith.truncf %38 : vector<16x8xf32> to vector<16x8xbf16>
      %cst_29 = arith.constant dense<0.000000e+00> : vector<16x8xf32>
      %49 = tpu.matmul %48, %27, %cst_29 {dimension_numbers = #tpu.dot_dimension_numbers<[1], [0], [0], [1], [0, 0, 1, 1], [], []>} : vector<16x8xbf16>, vector<8x8xbf16>, vector<16x8xf32> -> vector<16x8xf32>
      %50 = arith.addf %47, %49 : vector<16x8xf32>
      %c0_30 = arith.constant 0 : index
      %c0_31 = arith.constant 0 : index
      %51 = vector.load %arg15[%c0_30, %c0_31] : memref<16x8xf32, #tpu.memory_space<vmem>>, vector<16x8xf32>
      tpu.vector_store %arg15[%c0_30, %c0_31], %50 {strides = array<i32>} : memref<16x8xf32, #tpu.memory_space<vmem>>, vector<16x8xf32>,
      %c0_32 = arith.constant 0 : index
      %c0_33 = arith.constant 0 : index
      %52 = vector.load %arg13[%c0_32, %c0_33] : memref<16x1xf32, #tpu.memory_space<vmem>>, vector<16x1xf32>
      tpu.vector_store %arg13[%c0_32, %c0_33], %33 {strides = array<i32>} : memref<16x1xf32, #tpu.memory_space<vmem>>, vector<16x1xf32>,
    } else {
    }
    %6 = arith.cmpi eq, %arg3, %arg2 : i32
    %7 = arith.extui %6 : i1 to i32
    %c0_i32_2 = arith.constant 0 : i32
    %8 = arith.cmpi ne, %7, %c0_i32_2 : i32
    scf.if %8 {
      %c0 = arith.constant 0 : index
      %c0_5 = arith.constant 0 : index
      %c0_6 = arith.constant 0 : index
      %c0_7 = arith.constant 0 : index
      %12 = vector.load %arg5[%c0, %c0_5, %c0_6, %c0_7] : memref<1x1x8x8xbf16, #tpu.memory_space<vmem>>, vector<1x1x8x8xbf16>
      %13 = vector.shape_cast %12 : vector<1x1x8x8xbf16> to vector<8x8xbf16>
      %14 = arith.extf %13 : vector<8x8xbf16> to vector<8x8xf32>
      %c0_8 = arith.constant 0 : index
      %c0_9 = arith.constant 0 : index
      %15 = vector.load %arg9[%c0_8, %c0_9] : memref<8x8xf32, #tpu.memory_space<vmem>>, vector<8x8xf32>
      %16 = arith.mulf %14, %15 : vector<8x8xf32>
      %17 = vector.extract_strided_slice %14 {offsets = [0, 4], sizes = [8, 4], strides = [1, 1]} : vector<8x8xf32> to vector<8x4xf32>
      %cst = arith.constant 0.000000e+00 : f32
      %18 = vector.broadcast %cst : f32 to vector<8x4xf32>
      %19 = arith.subf %18, %17 : vector<8x4xf32>
      %20 = vector.extract_strided_slice %14 {offsets = [0, 0], sizes = [8, 4], strides = [1, 1]} : vector<8x8xf32> to vector<8x4xf32>
      %21 = tpu.concatenate %19, %20 in 1 : vector<8x4xf32>, vector<8x4xf32> -> vector<8x8xf32>
      %c0_10 = arith.constant 0 : index
      %c0_11 = arith.constant 0 : index
      %22 = vector.load %arg10[%c0_10, %c0_11] : memref<8x8xf32, #tpu.memory_space<vmem>>, vector<8x8xf32>
      %23 = arith.mulf %21, %22 : vector<8x8xf32>
      %24 = arith.addf %16, %23 : vector<8x8xf32>
      %25 = arith.truncf %24 : vector<8x8xf32> to vector<8x8xbf16>
      %c0_12 = arith.constant 0 : index
      %c0_13 = arith.constant 0 : index
      %c0_14 = arith.constant 0 : index
      %c0_15 = arith.constant 0 : index
      %26 = vector.load %arg6[%c0_12, %c0_13, %c0_14, %c0_15] : memref<1x1x8x8xbf16, #tpu.memory_space<vmem>>, vector<1x1x8x8xbf16>
      %27 = vector.shape_cast %26 : vector<1x1x8x8xbf16> to vector<8x8xbf16>
      %c0_16 = arith.constant 0 : index
      %c0_17 = arith.constant 0 : index
      %28 = vector.load %arg12[%c0_16, %c0_17] : memref<16x8xbf16, #tpu.memory_space<vmem>>, vector<16x8xbf16>
      %cst_18 = arith.constant dense<0.000000e+00> : vector<16x8xf32>
      %29 = tpu.matmul %28, %25, %cst_18 {dimension_numbers = #tpu.dot_dimension_numbers<[1], [1], [0], [0], [0, 0, 1, 0], [], []>} : vector<16x8xbf16>, vector<8x8xbf16>, vector<16x8xf32> -> vector<16x8xf32>
      %c8_i32 = arith.constant 8 : i32
      %30 = arith.muli %arg2, %c8_i32 : i32
      %31 = tpu.iota {dimensions = array<i32: 0>} : vector<16x8xi32>
      %c8_i32_19 = arith.constant 8 : i32
      %c0_i32_20 = arith.constant 0 : i32
      %32 = arith.cmpi eq, %c8_i32_19, %c0_i32_20 : i32
      %c1_i32 = arith.constant 1 : i32
      %33 = arith.select %32, %c1_i32, %c8_i32_19 : i32
      %34 = vector.broadcast %33 : i32 to vector<16x8xi32>
      %35 = arith.remsi %31, %34 : vector<16x8xi32>
      %c0_i32_21 = arith.constant 0 : i32
      %36 = vector.broadcast %c0_i32_21 : i32 to vector<16x8xi32>
      %37 = arith.cmpi ne, %35, %36 : vector<16x8xi32>
      %c0_i32_22 = arith.constant 0 : i32
      %38 = vector.broadcast %c0_i32_22 : i32 to vector<16x8xi32>
      %39 = arith.cmpi slt, %35, %38 : vector<16x8xi32>
      %c0_i32_23 = arith.constant 0 : i32
      %40 = arith.cmpi slt, %33, %c0_i32_23 : i32
      %41 = vector.broadcast %40 : i1 to vector<16x8xi1>
      %42 = vector.broadcast %41 : vector<16x8xi1> to vector<16x8xi1>
      %43 = arith.xori %39, %42 : vector<16x8xi1>
      %44 = arith.andi %43, %37 : vector<16x8xi1>
      %45 = vector.broadcast %33 : i32 to vector<16x8xi32>
      %46 = arith.addi %35, %45 : vector<16x8xi32>
      %47 = arith.select %44, %46, %35 : vector<16x8xi1>, vector<16x8xi32>
      %48 = vector.broadcast %30 : i32 to vector<16x8xi32>
      %49 = arith.addi %48, %47 : vector<16x8xi32>
      %c8_i32_24 = arith.constant 8 : i32
      %50 = arith.muli %arg3, %c8_i32_24 : i32
      %51 = tpu.iota {dimensions = array<i32: 1>} : vector<16x8xi32>
      %52 = vector.broadcast %50 : i32 to vector<16x8xi32>
      %53 = arith.addi %52, %51 : vector<16x8xi32>
      %54 = arith.cmpi sle, %53, %49 : vector<16x8xi32>
      %cst_25 = arith.constant -1.000000e+30 : f32
      %55 = vector.broadcast %cst_25 : f32 to vector<16x8xf32>
      %56 = arith.select %54, %29, %55 : vector<16x8xi1>, vector<16x8xf32>
      %c0_26 = arith.constant 0 : index
      %c0_27 = arith.constant 0 : index
      %57 = vector.load %arg13[%c0_26, %c0_27] : memref<16x1xf32, #tpu.memory_space<vmem>>, vector<16x1xf32>
      %cst_28 = arith.constant dense<0xFF800000> : vector<16xf32>
      %58 = vector.multi_reduction <maximumf>, %56, %cst_28 [1] : vector<16x8xf32> to vector<16xf32>
      %59 = vector.shape_cast %58 : vector<16xf32> to vector<16x1xf32>
      %60 = arith.maximumf %57, %59 : vector<16x1xf32>
      %61 = arith.subf %57, %60 : vector<16x1xf32>
      %62 = math.exp %61 : vector<16x1xf32>
      %63 = vector.broadcast %60 : vector<16x1xf32> to vector<16x8xf32>
      %64 = arith.subf %56, %63 : vector<16x8xf32>
      %65 = math.exp %64 : vector<16x8xf32>
      %c0_29 = arith.constant 0 : index
      %c0_30 = arith.constant 0 : index
      %66 = vector.load %arg14[%c0_29, %c0_30] : memref<16x1xf32, #tpu.memory_space<vmem>>, vector<16x1xf32>
      %67 = arith.mulf %62, %66 : vector<16x1xf32>
      %cst_31 = arith.constant dense<0.000000e+00> : vector<16xf32>
      %68 = vector.multi_reduction <add>, %65, %cst_31 [1] : vector<16x8xf32> to vector<16xf32>
      %69 = vector.shape_cast %68 : vector<16xf32> to vector<16x1xf32>
      %70 = arith.addf %67, %69 : vector<16x1xf32>
      %c0_32 = arith.constant 0 : index
      %c0_33 = arith.constant 0 : index
      %71 = vector.load %arg14[%c0_32, %c0_33] : memref<16x1xf32, #tpu.memory_space<vmem>>, vector<16x1xf32>
      tpu.vector_store %arg14[%c0_32, %c0_33], %70 {strides = array<i32>} : memref<16x1xf32, #tpu.memory_space<vmem>>, vector<16x1xf32>,
      %c0_34 = arith.constant 0 : index
      %c0_35 = arith.constant 0 : index
      %72 = vector.load %arg15[%c0_34, %c0_35] : memref<16x8xf32, #tpu.memory_space<vmem>>, vector<16x8xf32>
      %73 = vector.broadcast %62 : vector<16x1xf32> to vector<16x8xf32>
      %74 = arith.mulf %73, %72 : vector<16x8xf32>
      %75 = arith.truncf %65 : vector<16x8xf32> to vector<16x8xbf16>
      %cst_36 = arith.constant dense<0.000000e+00> : vector<16x8xf32>
      %76 = tpu.matmul %75, %27, %cst_36 {dimension_numbers = #tpu.dot_dimension_numbers<[1], [0], [0], [1], [0, 0, 1, 1], [], []>} : vector<16x8xbf16>, vector<8x8xbf16>, vector<16x8xf32> -> vector<16x8xf32>
      %77 = arith.addf %74, %76 : vector<16x8xf32>
      %c0_37 = arith.constant 0 : index
      %c0_38 = arith.constant 0 : index
      %78 = vector.load %arg15[%c0_37, %c0_38] : memref<16x8xf32, #tpu.memory_space<vmem>>, vector<16x8xf32>
      tpu.vector_store %arg15[%c0_37, %c0_38], %77 {strides = array<i32>} : memref<16x8xf32, #tpu.memory_space<vmem>>, vector<16x8xf32>,
      %c0_39 = arith.constant 0 : index
      %c0_40 = arith.constant 0 : index
      %79 = vector.load %arg13[%c0_39, %c0_40] : memref<16x1xf32, #tpu.memory_space<vmem>>, vector<16x1xf32>
      tpu.vector_store %arg13[%c0_39, %c0_40], %60 {strides = array<i32>} : memref<16x1xf32, #tpu.memory_space<vmem>>, vector<16x1xf32>,
    } else {
    }
    %c0_i32_3 = arith.constant 0 : i32
    %9 = arith.cmpi eq, %arg3, %c0_i32_3 : i32
    %10 = arith.extui %9 : i1 to i32
    %c0_i32_4 = arith.constant 0 : i32
    %11 = arith.cmpi ne, %10, %c0_i32_4 : i32
    scf.if %11 {
      %c0 = arith.constant 0 : index
      %c0_5 = arith.constant 0 : index
      %12 = vector.load %arg15[%c0, %c0_5] : memref<16x8xf32, #tpu.memory_space<vmem>>, vector<16x8xf32>
      %c0_6 = arith.constant 0 : index
      %c0_7 = arith.constant 0 : index
      %13 = vector.load %arg14[%c0_6, %c0_7] : memref<16x1xf32, #tpu.memory_space<vmem>>, vector<16x1xf32>
      %14 = vector.broadcast %13 : vector<16x1xf32> to vector<16x8xf32>
      %15 = arith.divf %12, %14 : vector<16x8xf32>
      %16 = vector.shape_cast %15 : vector<16x8xf32> to vector<2x8x8xf32>
      %17 = arith.truncf %16 : vector<2x8x8xf32> to vector<2x8x8xbf16>
      %c0_8 = arith.constant 0 : index
      %c0_9 = arith.constant 0 : index
      %c0_10 = arith.constant 0 : index
      %c0_11 = arith.constant 0 : index
      %18 = vector.load %arg11[%c0_8, %c0_9, %c0_10, %c0_11] : memref<1x2x8x8xbf16, #tpu.memory_space<vmem>>, vector<1x2x8x8xbf16>
      %19 = vector.shape_cast %18 : vector<1x2x8x8xbf16> to vector<2x8x8xbf16>
      %20 = vector.shape_cast %17 : vector<2x8x8xbf16> to vector<1x2x8x8xbf16>
      tpu.vector_store %arg11[%c0_8, %c0_9, %c0_10, %c0_11], %20 {strides = array<i32>} : memref<1x2x8x8xbf16, #tpu.memory_space<vmem>>, vector<1x2x8x8xbf16>,
    } else {
    }
    return
  }
  func.func @transform_0(%arg0: i32, %arg1: i32, %arg2: i32, %arg3: i32) -> (i32, i32, i32, i32) {
    %c0_i32 = arith.constant 0 : i32
    %c0_i32_0 = arith.constant 0 : i32
    return %arg0, %arg1, %arg2, %c0_i32 : i32, i32, i32, i32
  }
  func.func @transform_1(%arg0: i32, %arg1: i32, %arg2: i32, %arg3: i32) -> (i32, i32, i32, i32) {
    %0 = arith.minsi %arg3, %arg2 : i32
    %c0_i32 = arith.constant 0 : i32
    %c0_i32_0 = arith.constant 0 : i32
    return %arg0, %arg1, %0, %c0_i32 : i32, i32, i32, i32
  }
  func.func @transform_2(%arg0: i32, %arg1: i32, %arg2: i32, %arg3: i32) -> (i32, i32, i32, i32) {
    %0 = arith.minsi %arg3, %arg2 : i32
    %c0_i32 = arith.constant 0 : i32
    %c0_i32_0 = arith.constant 0 : i32
    return %arg0, %arg1, %0, %c0_i32 : i32, i32, i32, i32
  }
  func.func @transform_3(%arg0: i32, %arg1: i32, %arg2: i32, %arg3: i32) -> (i32, i32) {
    %c0_i32 = arith.constant 0 : i32
    %c0_i32_0 = arith.constant 0 : i32
    return %arg2, %c0_i32 : i32, i32
  }
  func.func @transform_4(%arg0: i32, %arg1: i32, %arg2: i32, %arg3: i32) -> (i32, i32) {
    %c0_i32 = arith.constant 0 : i32
    %c0_i32_0 = arith.constant 0 : i32
    return %arg2, %c0_i32 : i32, i32
  }
  func.func @transform_5(%arg0: i32, %arg1: i32, %arg2: i32, %arg3: i32) -> (i32, i32) {
    %0 = arith.minsi %arg3, %arg2 : i32
    %c0_i32 = arith.constant 0 : i32
    %c0_i32_0 = arith.constant 0 : i32
    return %0, %c0_i32 : i32, i32
  }
  func.func @transform_6(%arg0: i32, %arg1: i32, %arg2: i32, %arg3: i32) -> (i32, i32) {
    %0 = arith.minsi %arg3, %arg2 : i32
    %c0_i32 = arith.constant 0 : i32
    %c0_i32_0 = arith.constant 0 : i32
    return %0, %c0_i32 : i32, i32
  }
  func.func @transform_7(%arg0: i32, %arg1: i32, %arg2: i32, %arg3: i32) -> (i32, i32, i32, i32) {
    %c0_i32 = arith.constant 0 : i32
    %c0_i32_0 = arith.constant 0 : i32
    return %arg0, %arg1, %arg2, %c0_i32 : i32, i32, i32, i32
  }
}

module attributes {stable_mosaic.version = 11 : i64} {
  func.func @_matmul_residual_kernel(%arg0: i32, %arg1: i32, %arg2: memref<16x32xbf16, #tpu.memory_space<vmem>>, %arg3: memref<32x32xbf16, #tpu.memory_space<vmem>>, %arg4: memref<16x32xf32, #tpu.memory_space<vmem>>, %arg5: memref<16x32xf32, #tpu.memory_space<vmem>>) attributes {dimension_semantics = [#tpu.dimension_semantics<parallel>, #tpu.dimension_semantics<parallel>], iteration_bounds = array<i64: 1, 1>, scalar_prefetch = 0 : i64, scratch_operands = 0 : i64, tpu.core_type = #tpu.core_type<tc>, window_params = [{transform_indices = @transform_0, window_bounds = array<i64: 16, 32>}, {transform_indices = @transform_1, window_bounds = array<i64: 32, 32>}, {transform_indices = @transform_2, window_bounds = array<i64: 16, 32>}, {transform_indices = @transform_3, window_bounds = array<i64: 16, 32>}]} {
    %c0 = arith.constant 0 : index
    %c0_0 = arith.constant 0 : index
    %0 = vector.load %arg2[%c0, %c0_0] : memref<16x32xbf16, #tpu.memory_space<vmem>>, vector<16x32xbf16>
    %c0_1 = arith.constant 0 : index
    %c0_2 = arith.constant 0 : index
    %1 = vector.load %arg3[%c0_1, %c0_2] : memref<32x32xbf16, #tpu.memory_space<vmem>>, vector<32x32xbf16>
    %cst = arith.constant dense<0.000000e+00> : vector<16x32xf32>
    %2 = tpu.matmul %0, %1, %cst {dimension_numbers = #tpu.dot_dimension_numbers<[1], [0], [0], [1], [0, 0, 1, 1], [], []>} : vector<16x32xbf16>, vector<32x32xbf16>, vector<16x32xf32> -> vector<16x32xf32>
    %c0_3 = arith.constant 0 : index
    %c0_4 = arith.constant 0 : index
    %3 = vector.load %arg4[%c0_3, %c0_4] : memref<16x32xf32, #tpu.memory_space<vmem>>, vector<16x32xf32>
    %4 = arith.addf %3, %2 : vector<16x32xf32>
    %c0_5 = arith.constant 0 : index
    %c0_6 = arith.constant 0 : index
    %5 = vector.load %arg5[%c0_5, %c0_6] : memref<16x32xf32, #tpu.memory_space<vmem>>, vector<16x32xf32>
    tpu.vector_store %arg5[%c0_5, %c0_6], %4 {strides = array<i32>} : memref<16x32xf32, #tpu.memory_space<vmem>>, vector<16x32xf32>,
    return
  }
  func.func @transform_0(%arg0: i32, %arg1: i32) -> (i32, i32) {
    %c0_i32 = arith.constant 0 : i32
    %c0_i32_0 = arith.constant 0 : i32
    return %arg0, %c0_i32 : i32, i32
  }
  func.func @transform_1(%arg0: i32, %arg1: i32) -> (i32, i32) {
    %c0_i32 = arith.constant 0 : i32
    %c0_i32_0 = arith.constant 0 : i32
    return %c0_i32, %arg1 : i32, i32
  }
  func.func @transform_2(%arg0: i32, %arg1: i32) -> (i32, i32) {
    %c0_i32 = arith.constant 0 : i32
    return %arg0, %arg1 : i32, i32
  }
  func.func @transform_3(%arg0: i32, %arg1: i32) -> (i32, i32) {
    %c0_i32 = arith.constant 0 : i32
    return %arg0, %arg1 : i32, i32
  }
}

module attributes {stable_mosaic.version = 11 : i64} {
  func.func @_ffn_kernel(%arg0: i32, %arg1: i32, %arg2: memref<16x32xf32, #tpu.memory_space<vmem>>, %arg3: memref<32x64xbf16, #tpu.memory_space<vmem>>, %arg4: memref<32x64xbf16, #tpu.memory_space<vmem>>, %arg5: memref<64x32xbf16, #tpu.memory_space<vmem>>, %arg6: memref<1x32xf32, #tpu.memory_space<vmem>>, %arg7: memref<16x32xf32, #tpu.memory_space<vmem>>, %arg8: memref<16x32xbf16, #tpu.memory_space<vmem>>, %arg9: memref<16x32xf32, #tpu.memory_space<vmem>>) attributes {dimension_semantics = [#tpu.dimension_semantics<parallel>, #tpu.dimension_semantics<arbitrary>], iteration_bounds = array<i64: 1, 1>, scalar_prefetch = 0 : i64, scratch_operands = 2 : i64, tpu.core_type = #tpu.core_type<tc>, window_params = [{transform_indices = @transform_0, window_bounds = array<i64: 16, 32>}, {transform_indices = @transform_1, window_bounds = array<i64: 32, 64>}, {transform_indices = @transform_2, window_bounds = array<i64: 32, 64>}, {transform_indices = @transform_3, window_bounds = array<i64: 64, 32>}, {pipeline_mode = #tpu.pipeline_mode<synchronous>, transform_indices = @transform_4, window_bounds = array<i64: 1, 32>}, {transform_indices = @transform_5, window_bounds = array<i64: 16, 32>}]} {
    %c0_i32 = arith.constant 0 : i32
    %0 = arith.cmpi eq, %arg1, %c0_i32 : i32
    %1 = arith.extui %0 : i1 to i32
    %c0_i32_0 = arith.constant 0 : i32
    %2 = arith.cmpi ne, %1, %c0_i32_0 : i32
    scf.if %2 {
      %c0_17 = arith.constant 0 : index
      %c0_18 = arith.constant 0 : index
      %24 = vector.load %arg2[%c0_17, %c0_18] : memref<16x32xf32, #tpu.memory_space<vmem>>, vector<16x32xf32>
      %25 = arith.mulf %24, %24 : vector<16x32xf32>
      %cst_19 = arith.constant dense<0.000000e+00> : vector<16xf32>
      %26 = vector.multi_reduction <add>, %25, %cst_19 [1] : vector<16x32xf32> to vector<16xf32>
      %27 = vector.shape_cast %26 : vector<16xf32> to vector<16x1xf32>
      %cst_20 = arith.constant 3.200000e+01 : f32
      %28 = vector.broadcast %cst_20 : f32 to vector<16x1xf32>
      %29 = arith.divf %27, %28 : vector<16x1xf32>
      %cst_21 = arith.constant 9.99999974E-6 : f32
      %30 = vector.broadcast %cst_21 : f32 to vector<16x1xf32>
      %31 = arith.addf %29, %30 : vector<16x1xf32>
      %32 = math.rsqrt %31 : vector<16x1xf32>
      %33 = vector.broadcast %32 : vector<16x1xf32> to vector<16x32xf32>
      %34 = arith.mulf %24, %33 : vector<16x32xf32>
      %c0_22 = arith.constant 0 : index
      %c0_23 = arith.constant 0 : index
      %35 = vector.load %arg6[%c0_22, %c0_23] : memref<1x32xf32, #tpu.memory_space<vmem>>, vector<1x32xf32>
      %36 = vector.broadcast %35 : vector<1x32xf32> to vector<16x32xf32>
      %37 = arith.mulf %34, %36 : vector<16x32xf32>
      %38 = arith.truncf %37 : vector<16x32xf32> to vector<16x32xbf16>
      %c0_24 = arith.constant 0 : index
      %c0_25 = arith.constant 0 : index
      %39 = vector.load %arg8[%c0_24, %c0_25] : memref<16x32xbf16, #tpu.memory_space<vmem>>, vector<16x32xbf16>
      tpu.vector_store %arg8[%c0_24, %c0_25], %38 {strides = array<i32>} : memref<16x32xbf16, #tpu.memory_space<vmem>>, vector<16x32xbf16>,
      %cst_26 = arith.constant 0.000000e+00 : f32
      %40 = vector.broadcast %cst_26 : f32 to vector<16x32xf32>
      %c0_27 = arith.constant 0 : index
      %c0_28 = arith.constant 0 : index
      %41 = vector.load %arg9[%c0_27, %c0_28] : memref<16x32xf32, #tpu.memory_space<vmem>>, vector<16x32xf32>
      tpu.vector_store %arg9[%c0_27, %c0_28], %40 {strides = array<i32>} : memref<16x32xf32, #tpu.memory_space<vmem>>, vector<16x32xf32>,
    } else {
    }
    %c0 = arith.constant 0 : index
    %c0_1 = arith.constant 0 : index
    %3 = vector.load %arg8[%c0, %c0_1] : memref<16x32xbf16, #tpu.memory_space<vmem>>, vector<16x32xbf16>
    %c0_2 = arith.constant 0 : index
    %c0_3 = arith.constant 0 : index
    %4 = vector.load %arg3[%c0_2, %c0_3] : memref<32x64xbf16, #tpu.memory_space<vmem>>, vector<32x64xbf16>
    %cst = arith.constant dense<0.000000e+00> : vector<16x64xf32>
    %5 = tpu.matmul %3, %4, %cst {dimension_numbers = #tpu.dot_dimension_numbers<[1], [0], [0], [1], [0, 0, 1, 1], [], []>} : vector<16x32xbf16>, vector<32x64xbf16>, vector<16x64xf32> -> vector<16x64xf32>
    %c0_4 = arith.constant 0 : index
    %c0_5 = arith.constant 0 : index
    %6 = vector.load %arg4[%c0_4, %c0_5] : memref<32x64xbf16, #tpu.memory_space<vmem>>, vector<32x64xbf16>
    %cst_6 = arith.constant dense<0.000000e+00> : vector<16x64xf32>
    %7 = tpu.matmul %3, %6, %cst_6 {dimension_numbers = #tpu.dot_dimension_numbers<[1], [0], [0], [1], [0, 0, 1, 1], [], []>} : vector<16x32xbf16>, vector<32x64xbf16>, vector<16x64xf32> -> vector<16x64xf32>
    %8 = arith.negf %5 : vector<16x64xf32>
    %9 = math.exp %8 : vector<16x64xf32>
    %cst_7 = arith.constant 1.000000e+00 : f32
    %10 = vector.broadcast %cst_7 : f32 to vector<16x64xf32>
    %11 = arith.addf %10, %9 : vector<16x64xf32>
    %12 = arith.divf %10, %11 : vector<16x64xf32>
    %13 = arith.mulf %5, %12 : vector<16x64xf32>
    %14 = arith.mulf %13, %7 : vector<16x64xf32>
    %c0_8 = arith.constant 0 : index
    %c0_9 = arith.constant 0 : index
    %15 = vector.load %arg9[%c0_8, %c0_9] : memref<16x32xf32, #tpu.memory_space<vmem>>, vector<16x32xf32>
    %16 = arith.truncf %14 : vector<16x64xf32> to vector<16x64xbf16>
    %c0_10 = arith.constant 0 : index
    %c0_11 = arith.constant 0 : index
    %17 = vector.load %arg5[%c0_10, %c0_11] : memref<64x32xbf16, #tpu.memory_space<vmem>>, vector<64x32xbf16>
    %cst_12 = arith.constant dense<0.000000e+00> : vector<16x32xf32>
    %18 = tpu.matmul %16, %17, %cst_12 {dimension_numbers = #tpu.dot_dimension_numbers<[1], [0], [0], [1], [0, 0, 1, 1], [], []>} : vector<16x64xbf16>, vector<64x32xbf16>, vector<16x32xf32> -> vector<16x32xf32>
    %19 = arith.addf %15, %18 : vector<16x32xf32>
    %c0_13 = arith.constant 0 : index
    %c0_14 = arith.constant 0 : index
    %20 = vector.load %arg9[%c0_13, %c0_14] : memref<16x32xf32, #tpu.memory_space<vmem>>, vector<16x32xf32>
    tpu.vector_store %arg9[%c0_13, %c0_14], %19 {strides = array<i32>} : memref<16x32xf32, #tpu.memory_space<vmem>>, vector<16x32xf32>,
    %c0_i32_15 = arith.constant 0 : i32
    %21 = arith.cmpi eq, %arg1, %c0_i32_15 : i32
    %22 = arith.extui %21 : i1 to i32
    %c0_i32_16 = arith.constant 0 : i32
    %23 = arith.cmpi ne, %22, %c0_i32_16 : i32
    scf.if %23 {
      %c0_17 = arith.constant 0 : index
      %c0_18 = arith.constant 0 : index
      %24 = vector.load %arg2[%c0_17, %c0_18] : memref<16x32xf32, #tpu.memory_space<vmem>>, vector<16x32xf32>
      %c0_19 = arith.constant 0 : index
      %c0_20 = arith.constant 0 : index
      %25 = vector.load %arg9[%c0_19, %c0_20] : memref<16x32xf32, #tpu.memory_space<vmem>>, vector<16x32xf32>
      %26 = arith.addf %24, %25 : vector<16x32xf32>
      %c0_21 = arith.constant 0 : index
      %c0_22 = arith.constant 0 : index
      %27 = vector.load %arg7[%c0_21, %c0_22] : memref<16x32xf32, #tpu.memory_space<vmem>>, vector<16x32xf32>
      tpu.vector_store %arg7[%c0_21, %c0_22], %26 {strides = array<i32>} : memref<16x32xf32, #tpu.memory_space<vmem>>, vector<16x32xf32>,
    } else {
    }
    return
  }
  func.func @transform_0(%arg0: i32, %arg1: i32) -> (i32, i32) {
    %c0_i32 = arith.constant 0 : i32
    %c0_i32_0 = arith.constant 0 : i32
    return %arg0, %c0_i32 : i32, i32
  }
  func.func @transform_1(%arg0: i32, %arg1: i32) -> (i32, i32) {
    %c0_i32 = arith.constant 0 : i32
    %c0_i32_0 = arith.constant 0 : i32
    return %c0_i32, %arg1 : i32, i32
  }
  func.func @transform_2(%arg0: i32, %arg1: i32) -> (i32, i32) {
    %c0_i32 = arith.constant 0 : i32
    %c0_i32_0 = arith.constant 0 : i32
    return %c0_i32, %arg1 : i32, i32
  }
  func.func @transform_3(%arg0: i32, %arg1: i32) -> (i32, i32) {
    %c0_i32 = arith.constant 0 : i32
    %c0_i32_0 = arith.constant 0 : i32
    return %arg1, %c0_i32 : i32, i32
  }
  func.func @transform_4(%arg0: i32, %arg1: i32) -> (i32, i32) {
    %c0_i32 = arith.constant 0 : i32
    %c0_i32_0 = arith.constant 0 : i32
    %c0_i32_1 = arith.constant 0 : i32
    return %c0_i32, %c0_i32_0 : i32, i32
  }
  func.func @transform_5(%arg0: i32, %arg1: i32) -> (i32, i32) {
    %c0_i32 = arith.constant 0 : i32
    %c0_i32_0 = arith.constant 0 : i32
    return %arg0, %c0_i32 : i32, i32
  }
}

</mosaic_0001>

<llo_original>
// kernel: transformer_block_forward.6
$region0: #{transformer_block_forward.6}
  #allocation0 [shape = 'u32[]', space=smem, size = 0x4, offset = 0x4, fixed_abs, tag = 'smem constant byte address 0x4 - core index']
  #allocation1 [shape = 'u32[144,128]{1,0:T(1,128)}', space=vmem, size = 0x12000, scoped, tag = 'internal scratch']
  %s0 = inlined_call_operand.vmem [shape: bf16[16,32], index: 0, kind: input, shape index: {}]
  %s1 = inlined_call_operand.vmem [shape: bf16[32,32], index: 1, kind: input, shape index: {}]
  %s2 = inlined_call_operand.vmem [shape: f32[16,32], index: 2, kind: input, shape index: {}]
  %s3 = inlined_call_operand.vmem [shape: f32[16,32], index: 3, kind: output, shape index: {}]
  %s4 = sld [smem:[#allocation0]]
  $region22: #{transformer_block_forward.6} parent=0
    _
  %s6 = ssub.s32 1, %s4
  %s7 = scalar_select 0, %s6, %s4
  // Predicated region
  $region2: #{transformer_block_forward.6} parent=0 // pred_check
    _
  $region3: #{transformer_block_forward.6} parent=0 // pred_check_branch
    %9 = sbr.rel (0) target = $region5
  $region4: #{transformer_block_forward.6} parent=0 // pred_region
    _
  $region5: #{transformer_block_forward.6} parent=0 // pred_fallthru
    _
  // Predicated region
  $region6: #{transformer_block_forward.6} parent=0 // pred_check
    _
  $region7: #{transformer_block_forward.6} parent=0 // pred_check_branch
    %11 = sbr.rel (0) target = $region9
  $region8: #{transformer_block_forward.6} parent=0 // pred_region
    _
  $region9: #{transformer_block_forward.6} parent=0 // pred_fallthru
    _
  // Predicated region
  $region10: #{transformer_block_forward.6} parent=0 // pred_check
    _
  $region11: #{transformer_block_forward.6} parent=0 // pred_check_branch
    %13 = sbr.rel (0) target = $region13
  $region12: #{transformer_block_forward.6} parent=0 // pred_region
    _
  $region13: #{transformer_block_forward.6} parent=0 // pred_fallthru
    _
  %v15 = vld [vmem:[%s0] sm:$0xf]
  %v16 = vld [vmem:[%s0 + $0x4] sm:$0xf]
  %v17 = vld [vmem:[%s1] sm:$0xf]
  %v18 = vld [vmem:[%s1 + $0x4] sm:$0xf]
  %v19 = vld [vmem:[%s1 + $0x8] sm:$0xf]
  %v20 = vld [vmem:[%s1 + $0xc] sm:$0xf]
  %v23 = vunpack.c.l.b16 %v15
  %v24 = vunpack.c.l.b16 %v16
  %v25 = vpack.c.b16 %v24, %v23
  %v30 = vunpack.c.l.b16 %v17
  %v31 = vunpack.c.l.b16 %v18
  %v32 = vunpack.c.l.b16 %v19
  %v33 = vunpack.c.l.b16 %v20
  %v34 = vpack.c.b16 %v31, %v30
  %v35 = vpack.c.b16 %v33, %v32
  %vm38 = vcmask 261120
  %v40 = vsel %vm38, %v25, 0
  %42 = vmatprep.subr.bf16.mxu0 0
  %43 = vmatpush1.bf16.msra.mxu0 0
  %44 = vmatprep.subr.bf16.mxu0 0
  %45 = vmatpush1.bf16.msra.mxu0 0
  %46 = vmatprep.subr.bf16.mxu0 0
  %47 = vmatpush1.bf16.msra.mxu0 0
  %48 = vmatprep.subr.bf16.mxu0 0
  %49 = vmatpush1.bf16.msra.mxu0 0
  %50 = vmatprep.subr.bf16.mxu0 0
  %51 = vmatpush1.bf16.msra.mxu0 0
  %52 = vmatprep.subr.bf16.mxu0 0
  %53 = vmatpush1.bf16.msra.mxu0 0
  %54 = vmatprep.subr.bf16.mxu0 0
  %55 = vmatpush1.bf16.msra.mxu0 %v35
  %56 = vmatprep.subr.bf16.mxu0 0
  %57 = vmatpush1.bf16.msra.mxu0 %v34
  %58 = vmatprep.subr.bf16.mxu0 0
  %59 = vmatpush2.bf16.msra.mxu0 0
  %60 = vmatprep.subr.bf16.mxu0 0
  %61 = vmatpush2.bf16.msra.mxu0 0
  %62 = vmatprep.subr.bf16.mxu0 0
  %63 = vmatpush2.bf16.msra.mxu0 0
  %64 = vmatprep.subr.bf16.mxu0 0
  %65 = vmatpush2.bf16.msra.mxu0 0
  %66 = vmatprep.subr.bf16.mxu0 0
  %67 = vmatpush2.bf16.msra.mxu0 0
  %68 = vmatprep.subr.bf16.mxu0 0
  %69 = vmatpush2.bf16.msra.mxu0 0
  %70 = vmatprep.subr.bf16.mxu0 0
  %71 = vmatpush2.bf16.msra.mxu0 0
  %72 = vmatprep.subr.bf16.mxu0 0
  %73 = vmatpush2.bf16.msra.mxu0 0
  %74 = vmatprep.mubr.bf16.mxu0 0
  %75 = vmatmul.mubr.bf16.gmra.mxu0 %v40
  %v76 = vpop.f32.mrf.mxu0
  %v77 = vadd.f32 0.0, %v76
  %v78 = vpop.f32.mrf.mxu0
  %v79 = vpop.f32.mrf.mxu0
  %v80 = vadd.f32 0.0, %v79
  %v81 = vpop.f32.mrf.mxu0
  %82 = vdwg.mxu0
  %v83 = vld [vmem:[%s2] sm:$0xff]
  %v84 = vld [vmem:[%s2 + $0x8] sm:$0xff]
  %v85 = vadd.f32 %v83, %v77
  %v86 = vadd.f32 %v84, %v80
  %87 = vst.msk [vmem:[%s3] sm:$0xff] %vm38, %v85
  %88 = vst.msk [vmem:[%s3 + $0x8] sm:$0xff] %vm38, %v86
  // Predicated region
  $region14: #{transformer_block_forward.6} parent=0 // pred_check
    _
  $region15: #{transformer_block_forward.6} parent=0 // pred_check_branch
    %90 = sbr.rel (0) target = $region17
  $region16: #{transformer_block_forward.6} parent=0 // pred_region
    _
  $region17: #{transformer_block_forward.6} parent=0 // pred_fallthru
    _
  // Predicated region
  $region18: #{transformer_block_forward.6} parent=0 // pred_check
    _
  $region19: #{transformer_block_forward.6} parent=0 // pred_check_branch
    %92 = sbr.rel (0) target = $region21
  $region20: #{transformer_block_forward.6} parent=0 // pred_region
    _
  $region21: #{transformer_block_forward.6} parent=0 // pred_fallthru
    _

// kernel: transformer_block_forward.4
$region0: #{transformer_block_forward.4}
  #allocation0 [shape = 'u32[]', space=smem, size = 0x4, offset = 0x4, fixed_abs, tag = 'smem constant byte address 0x4 - core index']
  #allocation1 [shape = 'u32[144,128]{1,0:T(1,128)}', space=vmem, size = 0x12000, scoped, tag = 'internal scratch']
  #allocation2 [shape = 'bf16[16,32]{1,0:T(8,128)(2,1)}', space=vmem, size = 0x1000, scoped, tag = 'scratch operand']
  %s0 = inlined_call_operand.hbm [shape: f32[16,32], index: 0, kind: input, shape index: {}]
  %s1 = inlined_call_operand.vmem [shape: bf16[32,64], index: 1, kind: input, shape index: {}]
  %s2 = inlined_call_operand.vmem [shape: f32[1,64], index: 2, kind: input, shape index: {}]
  %s3 = inlined_call_operand.vmem [shape: f32[1,32], index: 3, kind: input, shape index: {}]
  %s4 = inlined_call_operand.vmem [shape: bf16[16,64], index: 4, kind: output, shape index: {}]
  %s5 = sld [smem:[#allocation0]]
  $region34: #{transformer_block_forward.4} parent=0
    _
  %s7 = ssub.s32 1, %s5
  %s8 = scalar_select 0, %s7, %s5
  $region1: #{transformer_block_forward.4} parent=0
    #allocation3 [shape = 'u8[8192]{0}', space=vmem, size = 0x2000, scoped, tag = 'input window, operand 0, single buffered']
    #allocation4 [shape = 's32[1]{0}', space=sflag, size = 0x4, scoped, tag = 'scoped memory for transformer_block_forward.4']
    %9 = vsyncpa [#allocation4], 0
    // Predicated region
    $region2: #{transformer_block_forward.4} parent=1 // pred_check
      _
    $region3: #{transformer_block_forward.4} parent=1 // pred_check_branch
      %11 = sbr.rel (0) target = $region5
    $region4: #{transformer_block_forward.4} parent=1 // pred_region
      %s13 = ssub.s32 256, 256
      %14 = vsyncadd [#allocation4], %s13
      %s15 = sshll.u32 [#allocation3], 4
      %s16 = int_to_ptr.vmem [resolvable:$true] %s15
      %21 = dma.hbm_to_vmem [thread:$0]  %s0, 256, %s16, [#allocation4], 128, 128, 8
    $region5: #{transformer_block_forward.4} parent=1 // pred_fallthru
      _
    // Predicated region
    $region6: #{transformer_block_forward.4} parent=1 // pred_check
      _
    $region7: #{transformer_block_forward.4} parent=1 // pred_check_branch
      %23 = sbr.rel (0) target = $region9
    $region8: #{transformer_block_forward.4} parent=1 // pred_region
      _
    $region9: #{transformer_block_forward.4} parent=1 // pred_fallthru
      _
    // Predicated region
    $region10: #{transformer_block_forward.4} parent=1 // pred_check
      _
    $region11: #{transformer_block_forward.4} parent=1 // pred_check_branch
      %25 = sbr.rel (0) target = $region13
    $region12: #{transformer_block_forward.4} parent=1 // pred_region
      _
    $region13: #{transformer_block_forward.4} parent=1 // pred_fallthru
      _
    // Predicated region
    $region14: #{transformer_block_forward.4} parent=1 // pred_check
      _
    $region15: #{transformer_block_forward.4} parent=1 // pred_check_branch
      %27 = sbr.rel (0) target = $region17
    $region16: #{transformer_block_forward.4} parent=1 // pred_region
      _
    $region17: #{transformer_block_forward.4} parent=1 // pred_fallthru
      _
    // Predicated region
    $region18: #{transformer_block_forward.4} parent=1 // pred_check
      _
    $region19: #{transformer_block_forward.4} parent=1 // pred_check_branch
      %29 = sbr.rel (0) target = $region21
    $region20: #{transformer_block_forward.4} parent=1 // pred_region
      %30 = dma.done [#allocation4], 256
    $region21: #{transformer_block_forward.4} parent=1 // pred_fallthru
      _
    %p32 = scmp.eq.s32.totalorder 0, 0
    // Predicated region
    $region22: #{transformer_block_forward.4} parent=1 // pred_check
      %p33 = pneg %p32
    $region23: #{transformer_block_forward.4} parent=1 // pred_check_branch
      %35 = sbr.rel (%p33) target = $region25
    $region24: #{transformer_block_forward.4} parent=1 // pred_region
      %v36 = vld [vmem:[#allocation3] sm:$0xff]
      %v37 = vld [vmem:[#allocation3 + $0x8] sm:$0xff]
      %v38 = vmul.f32 %v36, %v36
      %v39 = vmul.f32 %v37, %v37
      %vm40 = vcmask 261120
      %v41 = vsel %vm40, %v38, 0.0
      %42 = vadd.xlane.f32.xlu0 %v41
      %v43 = vpop.xlane.xlu0 %42
      %v44 = vsel %vm40, %v39, 0.0
      %45 = vadd.xlane.f32.xlu0 %v44
      %v46 = vpop.xlane.xlu0 %45
      %v47 = vrcp.pop 32.0
      %v48 = vmul.f32 %v43, %v47
      %v49 = vmul.f32 %v46, %v47
      %v50 = vadd.f32 %v48, 1e-05
      %v51 = vadd.f32 %v49, 1e-05
      %v52 = vrsqrt.pop %v50
      %v53 = vrsqrt.pop %v51
      %v54 = vmul.f32 %v36, %v52
      %v55 = vmul.f32 %v37, %v53
      %v56 = vld [vmem:[%s3] sm:$0x1]
      %v58 = vlaneseq
      %v59 = vshrl.u32 %v58, 7
      %v60 = vsub.s32 0, %v59
      %v61 = vrot.slane %v56, %v60
      %v63 = vmul.f32 %v54, %v61
      %v64 = vmul.f32 %v55, %v61
      %v65 = vpack.c.bf16 %v64, %v63
      %v67 = vunpack.c.l.b16 %v65
      %v68 = vunpack.c.h.b16 %v65
      %v69 = vpack.c.b16 %v67, %v67
      %v70 = vpack.c.b16 %v68, %v68
      %vm73 = vcmask 257024
      %74 = vst.msk [vmem:[#allocation2] sm:$0xf] %vm73, %v69
      %75 = vst.msk [vmem:[#allocation2 + $0x4] sm:$0xf] %vm73, %v70
    $region25: #{transformer_block_forward.4} parent=1 // pred_fallthru
      _
    %v76 = vld [vmem:[#allocation2] sm:$0xf]
    %v77 = vld [vmem:[#allocation2 + $0x4] sm:$0xf]
    %v78 = vld [vmem:[%s1] sm:$0xf]
    %v79 = vld [vmem:[%s1 + $0x4] sm:$0xf]
    %v80 = vld [vmem:[%s1 + $0x8] sm:$0xf]
    %v81 = vld [vmem:[%s1 + $0xc] sm:$0xf]
    %v82 = vld [vmem:[%s2] sm:$0x1]
    %v84 = vlaneseq
    %v85 = vshrl.u32 %v84, 7
    %v86 = vsub.s32 0, %v85
    %v87 = vrot.slane %v82, %v86
    %v91 = vunpack.c.l.b16 %v76
    %v92 = vunpack.c.l.b16 %v77
    %v93 = vpack.c.b16 %v92, %v91
    %v98 = vunpack.c.l.b16 %v78
    %v99 = vunpack.c.l.b16 %v79
    %v100 = vunpack.c.l.b16 %v80
    %v101 = vunpack.c.l.b16 %v81
    %v102 = vpack.c.b16 %v99, %v98
    %v103 = vpack.c.b16 %v101, %v100
    %vm106 = vcmask 261120
    %v108 = vsel %vm106, %v93, 0
    %110 = vmatprep.subr.bf16.mxu0 0
    %111 = vmatpush1.bf16.msra.mxu0 0
    %112 = vmatprep.subr.bf16.mxu0 0
    %113 = vmatpush1.bf16.msra.mxu0 0
    %114 = vmatprep.subr.bf16.mxu0 0
    %115 = vmatpush1.bf16.msra.mxu0 0
    %116 = vmatprep.subr.bf16.mxu0 0
    %117 = vmatpush1.bf16.msra.mxu0 0
    %118 = vmatprep.subr.bf16.mxu0 0
    %119 = vmatpush1.bf16.msra.mxu0 0
    %120 = vmatprep.subr.bf16.mxu0 0
    %121 = vmatpush1.bf16.msra.mxu0 0
    %122 = vmatprep.subr.bf16.mxu0 0
    %123 = vmatpush1.bf16.msra.mxu0 %v103
    %124 = vmatprep.subr.bf16.mxu0 0
    %125 = vmatpush1.bf16.msra.mxu0 %v102
    %126 = vmatprep.subr.bf16.mxu0 0
    %127 = vmatpush2.bf16.msra.mxu0 0
    %128 = vmatprep.subr.bf16.mxu0 0
    %129 = vmatpush2.bf16.msra.mxu0 0
    %130 = vmatprep.subr.bf16.mxu0 0
    %131 = vmatpush2.bf16.msra.mxu0 0
    %132 = vmatprep.subr.bf16.mxu0 0
    %133 = vmatpush2.bf16.msra.mxu0 0
    %134 = vmatprep.subr.bf16.mxu0 0
    %135 = vmatpush2.bf16.msra.mxu0 0
    %136 = vmatprep.subr.bf16.mxu0 0
    %137 = vmatpush2.bf16.msra.mxu0 0
    %138 = vmatprep.subr.bf16.mxu0 0
    %139 = vmatpush2.bf16.msra.mxu0 0
    %140 = vmatprep.subr.bf16.mxu0 0
    %141 = vmatpush2.bf16.msra.mxu0 0
    %142 = vmatprep.mubr.bf16.mxu0 0
    %143 = vmatmul.mubr.bf16.gmra.mxu0 %v108
    %v144 = vpop.f32.mrf.mxu0
    %v145 = vadd.f32 %v87, %v144
    %v146 = vpop.f32.mrf.mxu0
    %v147 = vpop.f32.mrf.mxu0
    %v148 = vadd.f32 %v87, %v147
    %v149 = vpop.f32.mrf.mxu0
    %150 = vdwg.mxu0
    %v151 = vpack.c.bf16 %v148, %v145
    %v153 = vunpack.c.l.b16 %v151
    %v154 = vunpack.c.h.b16 %v151
    %v155 = vpack.c.b16 %v153, %v153
    %v156 = vpack.c.b16 %v154, %v154
    %vm159 = vcmask 519168
    %160 = vst.msk [vmem:[%s4] sm:$0xf] %vm159, %v155
    %161 = vst.msk [vmem:[%s4 + $0x4] sm:$0xf] %vm159, %v156
    // Predicated region
    $region26: #{transformer_block_forward.4} parent=1 // pred_check
      _
    $region27: #{transformer_block_forward.4} parent=1 // pred_check_branch
      %163 = sbr.rel (0) target = $region29
    $region28: #{transformer_block_forward.4} parent=1 // pred_region
      _
    $region29: #{transformer_block_forward.4} parent=1 // pred_fallthru
      _
    // Predicated region
    $region30: #{transformer_block_forward.4} parent=1 // pred_check
      _
    $region31: #{transformer_block_forward.4} parent=1 // pred_check_branch
      %165 = sbr.rel (0) target = $region33
    $region32: #{transformer_block_forward.4} parent=1 // pred_region
      _
    $region33: #{transformer_block_forward.4} parent=1 // pred_fallthru
      _
    %166 = vsyncpa [#allocation4], 1

// kernel: transformer_block_forward.7
$region0: #{transformer_block_forward.7}
  #allocation0 [shape = 'u32[]', space=smem, size = 0x4, offset = 0x4, fixed_abs, tag = 'smem constant byte address 0x4 - core index']
  #allocation1 [shape = 'u32[144,128]{1,0:T(1,128)}', space=vmem, size = 0x12000, scoped, tag = 'internal scratch']
  #allocation2 [shape = 'bf16[16,32]{1,0:T(8,128)(2,1)}', space=vmem, size = 0x1000, scoped, tag = 'scratch operand']
  #allocation3 [shape = 'f32[16,32]{1,0:T(8,128)}', space=vmem, size = 0x2000, scoped, tag = 'scratch operand']
  %s0 = inlined_call_operand.vmem [shape: f32[16,32], index: 0, kind: input, shape index: {}]
  %s1 = inlined_call_operand.vmem [shape: bf16[32,64], index: 1, kind: input, shape index: {}]
  %s2 = inlined_call_operand.vmem [shape: bf16[32,64], index: 2, kind: input, shape index: {}]
  %s3 = inlined_call_operand.vmem [shape: bf16[64,32], index: 3, kind: input, shape index: {}]
  %s4 = inlined_call_operand.vmem [shape: f32[1,32], index: 4, kind: input, shape index: {}]
  %s5 = inlined_call_operand.hbm [shape: f32[16,32], index: 5, kind: output, shape index: {}]
  %s6 = sld [smem:[#allocation0]]
  $region38: #{transformer_block_forward.7} parent=0
    _
  %s8 = ssub.s32 1, %s6
  %s9 = scalar_select 0, %s8, %s6
  $region1: #{transformer_block_forward.7} parent=0
    #allocation4 [shape = 'u8[8192]{0}', space=vmem, size = 0x2000, scoped, tag = 'output window, operand 0, single buffered']
    #allocation5 [shape = 's32[1]{0}', space=sflag, size = 0x4, scoped, tag = 'scoped memory for transformer_block_forward.7']
    %10 = vsyncpa [#allocation5], 0
    // Predicated region
    $region2: #{transformer_block_forward.7} parent=1 // pred_check
      _
    $region3: #{transformer_block_forward.7} parent=1 // pred_check_branch
      %12 = sbr.rel (0) target = $region5
    $region4: #{transformer_block_forward.7} parent=1 // pred_region
      _
    $region5: #{transformer_block_forward.7} parent=1 // pred_fallthru
      _
    // Predicated region
    $region6: #{transformer_block_forward.7} parent=1 // pred_check
      _
    $region7: #{transformer_block_forward.7} parent=1 // pred_check_branch
      %14 = sbr.rel (0) target = $region9
    $region8: #{transformer_block_forward.7} parent=1 // pred_region
      _
    $region9: #{transformer_block_forward.7} parent=1 // pred_fallthru
      _
    // Predicated region
    $region10: #{transformer_block_forward.7} parent=1 // pred_check
      _
    $region11: #{transformer_block_forward.7} parent=1 // pred_check_branch
      %16 = sbr.rel (0) target = $region13
    $region12: #{transformer_block_forward.7} parent=1 // pred_region
      _
    $region13: #{transformer_block_forward.7} parent=1 // pred_fallthru
      _
    // Predicated region
    $region14: #{transformer_block_forward.7} parent=1 // pred_check
      _
    $region15: #{transformer_block_forward.7} parent=1 // pred_check_branch
      %18 = sbr.rel (0) target = $region17
    $region16: #{transformer_block_forward.7} parent=1 // pred_region
      _
    $region17: #{transformer_block_forward.7} parent=1 // pred_fallthru
      _
    // Predicated region
    $region18: #{transformer_block_forward.7} parent=1 // pred_check
      _
    $region19: #{transformer_block_forward.7} parent=1 // pred_check_branch
      %20 = sbr.rel (0) target = $region21
    $region20: #{transformer_block_forward.7} parent=1 // pred_region
      _
    $region21: #{transformer_block_forward.7} parent=1 // pred_fallthru
      _
    %p22 = scmp.eq.s32.totalorder 0, 0
    // Predicated region
    $region22: #{transformer_block_forward.7} parent=1 // pred_check
      %p23 = pneg %p22
    $region23: #{transformer_block_forward.7} parent=1 // pred_check_branch
      %25 = sbr.rel (%p23) target = $region25
    $region24: #{transformer_block_forward.7} parent=1 // pred_region
      %v26 = vld [vmem:[%s0] sm:$0xff]
      %v27 = vld [vmem:[%s0 + $0x8] sm:$0xff]
      %v28 = vmul.f32 %v26, %v26
      %v29 = vmul.f32 %v27, %v27
      %vm30 = vcmask 261120
      %v31 = vsel %vm30, %v28, 0.0
      %32 = vadd.xlane.f32.xlu0 %v31
      %v33 = vpop.xlane.xlu0 %32
      %v34 = vsel %vm30, %v29, 0.0
      %35 = vadd.xlane.f32.xlu0 %v34
      %v36 = vpop.xlane.xlu0 %35
      %v37 = vrcp.pop 32.0
      %v38 = vmul.f32 %v33, %v37
      %v39 = vmul.f32 %v36, %v37
      %v40 = vadd.f32 %v38, 1e-05
      %v41 = vadd.f32 %v39, 1e-05
      %v42 = vrsqrt.pop %v40
      %v43 = vrsqrt.pop %v41
      %v44 = vmul.f32 %v26, %v42
      %v45 = vmul.f32 %v27, %v43
      %v46 = vld [vmem:[%s4] sm:$0x1]
      %v48 = vlaneseq
      %v49 = vshrl.u32 %v48, 7
      %v50 = vsub.s32 0, %v49
      %v51 = vrot.slane %v46, %v50
      %v53 = vmul.f32 %v44, %v51
      %v54 = vmul.f32 %v45, %v51
      %v55 = vpack.c.bf16 %v54, %v53
      %v57 = vunpack.c.l.b16 %v55
      %v58 = vunpack.c.h.b16 %v55
      %v59 = vpack.c.b16 %v57, %v57
      %v60 = vpack.c.b16 %v58, %v58
      %vm63 = vcmask 257024
      %64 = vst.msk [vmem:[#allocation2] sm:$0xf] %vm63, %v59
      %65 = vst.msk [vmem:[#allocation2 + $0x4] sm:$0xf] %vm63, %v60
      %66 = vst.msk [vmem:[#allocation3] sm:$0xff] %vm30, 0.0
      %67 = vst.msk [vmem:[#allocation3 + $0x8] sm:$0xff] %vm30, 0.0
    $region25: #{transformer_block_forward.7} parent=1 // pred_fallthru
      _
    %v68 = vld [vmem:[#allocation2] sm:$0xf]
    %v69 = vld [vmem:[#allocation2 + $0x4] sm:$0xf]
    %v70 = vld [vmem:[%s1] sm:$0xf]
    %v71 = vld [vmem:[%s1 + $0x4] sm:$0xf]
    %v72 = vld [vmem:[%s1 + $0x8] sm:$0xf]
    %v73 = vld [vmem:[%s1 + $0xc] sm:$0xf]
    %v76 = vunpack.c.l.b16 %v68
    %v77 = vunpack.c.l.b16 %v69
    %v78 = vpack.c.b16 %v77, %v76
    %v83 = vunpack.c.l.b16 %v70
    %v84 = vunpack.c.l.b16 %v71
    %v85 = vunpack.c.l.b16 %v72
    %v86 = vunpack.c.l.b16 %v73
    %v87 = vpack.c.b16 %v84, %v83
    %v88 = vpack.c.b16 %v86, %v85
    %vm91 = vcmask 261120
    %v93 = vsel %vm91, %v78, 0
    %95 = vmatprep.subr.bf16.mxu0 0
    %96 = vmatpush1.bf16.msra.mxu0 0
    %97 = vmatprep.subr.bf16.mxu0 0
    %98 = vmatpush1.bf16.msra.mxu0 0
    %99 = vmatprep.subr.bf16.mxu0 0
    %100 = vmatpush1.bf16.msra.mxu0 0
    %101 = vmatprep.subr.bf16.mxu0 0
    %102 = vmatpush1.bf16.msra.mxu0 0
    %103 = vmatprep.subr.bf16.mxu0 0
    %104 = vmatpush1.bf16.msra.mxu0 0
    %105 = vmatprep.subr.bf16.mxu0 0
    %106 = vmatpush1.bf16.msra.mxu0 0
    %107 = vmatprep.subr.bf16.mxu0 0
    %108 = vmatpush1.bf16.msra.mxu0 %v88
    %109 = vmatprep.subr.bf16.mxu0 0
    %110 = vmatpush1.bf16.msra.mxu0 %v87
    %111 = vmatprep.subr.bf16.mxu0 0
    %112 = vmatpush2.bf16.msra.mxu0 0
    %113 = vmatprep.subr.bf16.mxu0 0
    %114 = vmatpush2.bf16.msra.mxu0 0
    %115 = vmatprep.subr.bf16.mxu0 0
    %116 = vmatpush2.bf16.msra.mxu0 0
    %117 = vmatprep.subr.bf16.mxu0 0
    %118 = vmatpush2.bf16.msra.mxu0 0
    %119 = vmatprep.subr.bf16.mxu0 0
    %120 = vmatpush2.bf16.msra.mxu0 0
    %121 = vmatprep.subr.bf16.mxu0 0
    %122 = vmatpush2.bf16.msra.mxu0 0
    %123 = vmatprep.subr.bf16.mxu0 0
    %124 = vmatpush2.bf16.msra.mxu0 0
    %125 = vmatprep.subr.bf16.mxu0 0
    %126 = vmatpush2.bf16.msra.mxu0 0
    %127 = vmatprep.mubr.bf16.mxu0 0
    %128 = vmatmul.mubr.bf16.gmra.mxu0 %v93
    %v129 = vpop.f32.mrf.mxu0
    %v130 = vadd.f32 0.0, %v129
    %v131 = vpop.f32.mrf.mxu0
    %v132 = vpop.f32.mrf.mxu0
    %v133 = vadd.f32 0.0, %v132
    %v134 = vpop.f32.mrf.mxu0
    %135 = vdwg.mxu0
    %v136 = vld [vmem:[%s2] sm:$0xf]
    %v137 = vld [vmem:[%s2 + $0x4] sm:$0xf]
    %v138 = vld [vmem:[%s2 + $0x8] sm:$0xf]
    %v139 = vld [vmem:[%s2 + $0xc] sm:$0xf]
    %v144 = vunpack.c.l.b16 %v136
    %v145 = vunpack.c.l.b16 %v137
    %v146 = vunpack.c.l.b16 %v138
    %v147 = vunpack.c.l.b16 %v139
    %v148 = vpack.c.b16 %v145, %v144
    %v149 = vpack.c.b16 %v147, %v146
    %152 = vmatprep.subr.bf16.mxu0 0
    %153 = vmatpush1.bf16.msra.mxu0 0
    %154 = vmatprep.subr.bf16.mxu0 0
    %155 = vmatpush1.bf16.msra.mxu0 0
    %156 = vmatprep.subr.bf16.mxu0 0
    %157 = vmatpush1.bf16.msra.mxu0 0
    %158 = vmatprep.subr.bf16.mxu0 0
    %159 = vmatpush1.bf16.msra.mxu0 0
    %160 = vmatprep.subr.bf16.mxu0 0
    %161 = vmatpush1.bf16.msra.mxu0 0
    %162 = vmatprep.subr.bf16.mxu0 0
    %163 = vmatpush1.bf16.msra.mxu0 0
    %164 = vmatprep.subr.bf16.mxu0 0
    %165 = vmatpush1.bf16.msra.mxu0 %v149
    %166 = vmatprep.subr.bf16.mxu0 0
    %167 = vmatpush1.bf16.msra.mxu0 %v148
    %168 = vmatprep.subr.bf16.mxu0 0
    %169 = vmatpush2.bf16.msra.mxu0 0
    %170 = vmatprep.subr.bf16.mxu0 0
    %171 = vmatpush2.bf16.msra.mxu0 0
    %172 = vmatprep.subr.bf16.mxu0 0
    %173 = vmatpush2.bf16.msra.mxu0 0
    %174 = vmatprep.subr.bf16.mxu0 0
    %175 = vmatpush2.bf16.msra.mxu0 0
    %176 = vmatprep.subr.bf16.mxu0 0
    %177 = vmatpush2.bf16.msra.mxu0 0
    %178 = vmatprep.subr.bf16.mxu0 0
    %179 = vmatpush2.bf16.msra.mxu0 0
    %180 = vmatprep.subr.bf16.mxu0 0
    %181 = vmatpush2.bf16.msra.mxu0 0
    %182 = vmatprep.subr.bf16.mxu0 0
    %183 = vmatpush2.bf16.msra.mxu0 0
    %184 = vmatprep.mubr.bf16.mxu0 0
    %185 = vmatmul.mubr.bf16.gmra.mxu0 %v93
    %v186 = vpop.f32.mrf.mxu0
    %v187 = vadd.f32 0.0, %v186
    %v188 = vpop.f32.mrf.mxu0
    %v189 = vpop.f32.mrf.mxu0
    %v190 = vadd.f32 0.0, %v189
    %v191 = vpop.f32.mrf.mxu0
    %192 = vdwg.mxu0
    %v193 = vxor.u32 %v130, 2147483648
    %v194 = vxor.u32 %v133, 2147483648
    %v195 = vmul.f32 %v193, 1.442695
    %v196 = vpow.pop %v195
    %v197 = vmul.f32 %v194, 1.442695
    %v198 = vpow.pop %v197
    %v199 = vadd.f32 %v196, 1.0
    %v200 = vadd.f32 %v198, 1.0
    %v201 = vrcp.pop %v199
    %v202 = vmul.f32 1.0, %v201
    %v203 = vrcp.pop %v200
    %v204 = vmul.f32 1.0, %v203
    %v205 = vmul.f32 %v130, %v202
    %v206 = vmul.f32 %v133, %v204
    %v207 = vmul.f32 %v205, %v187
    %v208 = vmul.f32 %v206, %v190
    %v209 = vld [vmem:[#allocation3] sm:$0xff]
    %v210 = vld [vmem:[#allocation3 + $0x8] sm:$0xff]
    %v211 = vpack.c.bf16 %v208, %v207
    %v212 = vld [vmem:[%s3] sm:$0xf]
    %v213 = vld [vmem:[%s3 + $0x4] sm:$0xf]
    %v214 = vld [vmem:[%s3 + $0x8] sm:$0xf]
    %v215 = vld [vmem:[%s3 + $0xc] sm:$0xf]
    %v216 = vld [vmem:[%s3 + $0x10] sm:$0xf]
    %v217 = vld [vmem:[%s3 + $0x14] sm:$0xf]
    %v218 = vld [vmem:[%s3 + $0x18] sm:$0xf]
    %v219 = vld [vmem:[%s3 + $0x1c] sm:$0xf]
    %v228 = vunpack.c.l.b16 %v212
    %v229 = vunpack.c.l.b16 %v213
    %v230 = vunpack.c.l.b16 %v214
    %v231 = vunpack.c.l.b16 %v215
    %v232 = vunpack.c.l.b16 %v216
    %v233 = vunpack.c.l.b16 %v217
    %v234 = vunpack.c.l.b16 %v218
    %v235 = vunpack.c.l.b16 %v219
    %v236 = vpack.c.b16 %v229, %v228
    %v237 = vpack.c.b16 %v231, %v230
    %v238 = vpack.c.b16 %v233, %v232
    %v239 = vpack.c.b16 %v235, %v234
    %vm244 = vcmask 523264
    %v246 = vsel %vm244, %v211, 0
    %248 = vmatprep.subr.bf16.mxu0 0
    %249 = vmatpush1.bf16.msra.mxu0 0
    %250 = vmatprep.subr.bf16.mxu0 0
    %251 = vmatpush1.bf16.msra.mxu0 0
    %252 = vmatprep.subr.bf16.mxu0 0
    %253 = vmatpush1.bf16.msra.mxu0 0
    %254 = vmatprep.subr.bf16.mxu0 0
    %255 = vmatpush1.bf16.msra.mxu0 0
    %256 = vmatprep.subr.bf16.mxu0 0
    %257 = vmatpush1.bf16.msra.mxu0 %v239
    %258 = vmatprep.subr.bf16.mxu0 0
    %259 = vmatpush1.bf16.msra.mxu0 %v238
    %260 = vmatprep.subr.bf16.mxu0 0
    %261 = vmatpush1.bf16.msra.mxu0 %v237
    %262 = vmatprep.subr.bf16.mxu0 0
    %263 = vmatpush1.bf16.msra.mxu0 %v236
    %264 = vmatprep.subr.bf16.mxu0 0
    %265 = vmatpush2.bf16.msra.mxu0 0
    %266 = vmatprep.subr.bf16.mxu0 0
    %267 = vmatpush2.bf16.msra.mxu0 0
    %268 = vmatprep.subr.bf16.mxu0 0
    %269 = vmatpush2.bf16.msra.mxu0 0
    %270 = vmatprep.subr.bf16.mxu0 0
    %271 = vmatpush2.bf16.msra.mxu0 0
    %272 = vmatprep.subr.bf16.mxu0 0
    %273 = vmatpush2.bf16.msra.mxu0 0
    %274 = vmatprep.subr.bf16.mxu0 0
    %275 = vmatpush2.bf16.msra.mxu0 0
    %276 = vmatprep.subr.bf16.mxu0 0
    %277 = vmatpush2.bf16.msra.mxu0 0
    %278 = vmatprep.subr.bf16.mxu0 0
    %279 = vmatpush2.bf16.msra.mxu0 0
    %280 = vmatprep.mubr.bf16.mxu0 0
    %281 = vmatmul.mubr.bf16.gmra.mxu0 %v246
    %v282 = vpop.f32.mrf.mxu0
    %v283 = vadd.f32 0.0, %v282
    %v284 = vpop.f32.mrf.mxu0
    %v285 = vpop.f32.mrf.mxu0
    %v286 = vadd.f32 0.0, %v285
    %v287 = vpop.f32.mrf.mxu0
    %288 = vdwg.mxu0
    %v289 = vadd.f32 %v209, %v283
    %v290 = vadd.f32 %v210, %v286
    %291 = vst.msk [vmem:[#allocation3] sm:$0xff] %vm91, %v289
    %292 = vst.msk [vmem:[#allocation3 + $0x8] sm:$0xff] %vm91, %v290
    // Predicated region
    $region26: #{transformer_block_forward.7} parent=1 // pred_check
      %p293 = pneg %p22
    $region27: #{transformer_block_forward.7} parent=1 // pred_check_branch
      %295 = sbr.rel (%p293) target = $region29
    $region28: #{transformer_block_forward.7} parent=1 // pred_region
      %v296 = vld [vmem:[%s0] sm:$0xff]
      %v297 = vld [vmem:[%s0 + $0x8] sm:$0xff]
      %v298 = vld [vmem:[#allocation3] sm:$0xff]
      %v299 = vld [vmem:[#allocation3 + $0x8] sm:$0xff]
      %v300 = vadd.f32 %v296, %v298
      %v301 = vadd.f32 %v297, %v299
      %302 = vst.msk [vmem:[#allocation4] sm:$0xff] %vm91, %v300
      %303 = vst.msk [vmem:[#allocation4 + $0x8] sm:$0xff] %vm91, %v301
    $region29: #{transformer_block_forward.7} parent=1 // pred_fallthru
      _
    // Predicated region
    $region30: #{transformer_block_forward.7} parent=1 // pred_check
      _
    $region31: #{transformer_block_forward.7} parent=1 // pred_check_branch
      %305 = sbr.rel (0) target = $region33
    $region32: #{transformer_block_forward.7} parent=1 // pred_region
      %s307 = ssub.s32 256, 256
      %308 = vsyncadd [#allocation5], %s307
      %s309 = sshll.u32 [#allocation4], 4
      %s310 = int_to_ptr.vmem [resolvable:$true] %s309
      %315 = dma.vmem_to_hbm [thread:$0]  %s310, 256, %s5, [#allocation5], 128, 128, 8
    $region33: #{transformer_block_forward.7} parent=1 // pred_fallthru
      _
    // Predicated region
    $region34: #{transformer_block_forward.7} parent=1 // pred_check
      _
    $region35: #{transformer_block_forward.7} parent=1 // pred_check_branch
      %317 = sbr.rel (0) target = $region37
    $region36: #{transformer_block_forward.7} parent=1 // pred_region
      %318 = dma.done [#allocation5], 256
    $region37: #{transformer_block_forward.7} parent=1 // pred_fallthru
      _
    %319 = vsyncpa [#allocation5], 1

// kernel: transformer_block_forward.5
$region0: #{transformer_block_forward.5}
  #allocation0 [shape = 'u32[]', space=smem, size = 0x4, offset = 0x4, fixed_abs, tag = 'smem constant byte address 0x4 - core index']
  #allocation1 [shape = 'u32[144,128]{1,0:T(1,128)}', space=vmem, size = 0x12000, scoped, tag = 'internal scratch']
  #allocation2 [shape = 'bf16[16,8]{1,0:T(8,128)(2,1)}', space=vmem, size = 0x1000, scoped, tag = 'scratch operand']
  #allocation3 [shape = 'f32[16,1]{1,0:T(8,128)}', space=vmem, size = 0x2000, scoped, tag = 'scratch operand']
  #allocation4 [shape = 'f32[16,1]{1,0:T(8,128)}', space=vmem, size = 0x2000, scoped, tag = 'scratch operand']
  #allocation5 [shape = 'f32[16,8]{1,0:T(8,128)}', space=vmem, size = 0x2000, scoped, tag = 'scratch operand']
  %s0 = inlined_call_operand.vmem [shape: bf16[2,4,8,8], index: 0, kind: input, shape index: {}]
  %s1 = inlined_call_operand.vmem [shape: bf16[2,2,8,8], index: 1, kind: input, shape index: {}]
  %s2 = inlined_call_operand.vmem [shape: bf16[2,2,8,8], index: 2, kind: input, shape index: {}]
  %s3 = inlined_call_operand.vmem [shape: f32[8,8], index: 3, kind: input, shape index: {}, may-alias: {3,5}]
  %s4 = inlined_call_operand.vmem [shape: f32[8,8], index: 4, kind: input, shape index: {}, may-alias: {4,6}]
  %s5 = inlined_call_operand.vmem [shape: f32[8,8], index: 5, kind: input, shape index: {}, may-alias: {3,5}]
  %s6 = inlined_call_operand.vmem [shape: f32[8,8], index: 6, kind: input, shape index: {}, may-alias: {4,6}]
  %s7 = inlined_call_operand.vmem [shape: bf16[2,4,8,8], index: 7, kind: output, shape index: {}]
  %s8 = sld [smem:[#allocation0]]
  $region77: #{transformer_block_forward.5} parent=0
    _
  %s10 = ssub.s32 1, %s8
  %s11 = scalar_select 0, %s10, %s8
  loop: start=0, step=1, limit=6
  $region2: #{transformer_block_forward.5} parent=0 // loop_pre_header
    _
  $region3: #{transformer_block_forward.5} parent=0 // loop_header
    %s13 = sphi 0, %s17
    %p14 = scmp.ge.s32.totalorder %s13, 6
    %s20 = sphi 0, %s46
    %s21 = sphi 0, %s42
    %s22 = sphi 0, %s38
    %s23 = sphi 0, %s34
    %s24 = sphi 0, %s20
    %s25 = sphi 0, %s21
    %s26 = sphi 0, %s22
    %s27 = sphi 0, %s23
    %s28 = sphi 0, %s24
    %s29 = sphi 0, %s25
    %s30 = sphi 0, %s26
    %s31 = sphi 0, %s27
    %s53 = sphi 0, %s55
    %s56 = sphi 0, %s53
    %s57 = sphi 0, %s56
    %s73 = sphi 0, %s57
    %s87 = sphi 0, %s89
    %s90 = sphi 0, %s87
    %s91 = sphi 0, %s90
    %s107 = sphi 0, %s91
    %s121 = sphi 0, %s123
    %s124 = sphi 0, %s121
    %s125 = sphi 0, %s124
    %s141 = sphi 0, %s125
    %s147 = sphi 0, %s149
    %s150 = sphi 0, %s147
    %s151 = sphi 0, %s150
    %s167 = sphi 0, %s151
    %s173 = sphi 0, %s175
    %s176 = sphi 0, %s173
    %s177 = sphi 0, %s176
    %s193 = sphi 0, %s177
    %s203 = sphi 0, %s205
    %s206 = sphi 0, %s203
    %s207 = sphi 0, %s206
    %s223 = sphi 0, %s207
    %s233 = sphi 0, %s235
    %s236 = sphi 0, %s233
    %s237 = sphi 0, %s236
    %s253 = sphi 0, %s237
    %s263 = sphi 0, %s265
    %s266 = sphi 0, %s263
    %s267 = sphi 0, %s266
    %s283 = sphi 0, %s267
  $region4: #{transformer_block_forward.5} parent=0 // loop_header_branch
    %16 = sbr.rel (%p14) target = $region8
  $region5: #{transformer_block_forward.5} parent=0 // loop_body
    %s18 = ssub.s32 %s13, 1
    %s19 = ssub.s32 %s13, 2
    %s32 = sadd.s32 1, %s23
    %p33 = scmp.ge.s32.totalorder %s32, 1
    %s34 = scalar_select %p33, 0, %s32
    %s35 = sadd.s32 1, %s22
    %s36 = scalar_select %p33, %s35, %s22
    %p37 = scmp.ge.s32.totalorder %s36, 1
    %s38 = scalar_select %p37, 0, %s36
    %s39 = sadd.s32 1, %s21
    %s40 = scalar_select %p37, %s39, %s21
    %p41 = scmp.ge.s32.totalorder %s40, 2
    %s42 = scalar_select %p41, 0, %s40
    %s43 = sadd.s32 1, %s20
    %s44 = scalar_select %p41, %s43, %s20
    %p45 = scmp.ge.s32.totalorder %s44, 2
    %s46 = scalar_select %p45, 0, %s44
    %s47 = ssub.s32 %s20, %s46
    %s48 = ssub.s32 %s21, %s42
    %s49 = sor.u32 %s47, %s48
    %s50 = ssub.s32 %s22, %s38
    %s51 = sor.u32 %s49, %s50
    %p52 = scmp.eq.s32.totalorder %s51, 0
    %s54 = sadd.s32 %s53, 1
    %s55 = scalar_select %p52, %s53, %s54
    %p58 = pneg %p52
    %p59 = scmp.eq.s32.totalorder %s13, 3
    %p60 = por %p58, %p59
    %p61 = scmp.ne.s32.totalorder %s53, %s56
    %p62 = scmp.eq.s32.totalorder %s13, 0
    %p63 = por %p61, %p62
    %p64 = scmp.ne.s32.totalorder %s53, %s56
    %p65 = scmp.eq.s32.totalorder %s18, 3
    %p66 = por %p64, %p65
    %p67 = scmp.ne.s32.totalorder %s56, %s57
    %p68 = scmp.eq.s32.totalorder %s18, 0
    %p69 = por %p67, %p68
    %p70 = scmp.ne.s32.totalorder %s56, %s57
    %p71 = scmp.eq.s32.totalorder %s19, 3
    %p72 = por %p70, %p71
    %p74 = scmp.ne.s32.totalorder %s57, %s73
    %p75 = scmp.eq.s32.totalorder %s19, 0
    %p76 = por %p74, %p75
    %p77 = scmp.lt.s32.totalorder %s23, %s22
    %s78 = scalar_select %p77, %s23, %s22
    %p79 = scmp.lt.s32.totalorder %s34, %s38
    %s80 = scalar_select %p79, %s34, %s38
    %s81 = ssub.s32 %s20, %s46
    %s82 = ssub.s32 %s21, %s42
    %s83 = sor.u32 %s81, %s82
    %s84 = ssub.s32 %s78, %s80
    %s85 = sor.u32 %s83, %s84
    %p86 = scmp.eq.s32.totalorder %s85, 0
    %s88 = sadd.s32 %s87, 1
    %s89 = scalar_select %p86, %s87, %s88
    %p92 = pneg %p86
    %p93 = scmp.eq.s32.totalorder %s13, 3
    %p94 = por %p92, %p93
    %p95 = scmp.ne.s32.totalorder %s87, %s90
    %p96 = scmp.eq.s32.totalorder %s13, 0
    %p97 = por %p95, %p96
    %p98 = scmp.ne.s32.totalorder %s87, %s90
    %p99 = scmp.eq.s32.totalorder %s18, 3
    %p100 = por %p98, %p99
    %p101 = scmp.ne.s32.totalorder %s90, %s91
    %p102 = scmp.eq.s32.totalorder %s18, 0
    %p103 = por %p101, %p102
    %p104 = scmp.ne.s32.totalorder %s90, %s91
    %p105 = scmp.eq.s32.totalorder %s19, 3
    %p106 = por %p104, %p105
    %p108 = scmp.ne.s32.totalorder %s91, %s107
    %p109 = scmp.eq.s32.totalorder %s19, 0
    %p110 = por %p108, %p109
    %p111 = scmp.lt.s32.totalorder %s23, %s22
    %s112 = scalar_select %p111, %s23, %s22
    %p113 = scmp.lt.s32.totalorder %s34, %s38
    %s114 = scalar_select %p113, %s34, %s38
    %s115 = ssub.s32 %s20, %s46
    %s116 = ssub.s32 %s21, %s42
    %s117 = sor.u32 %s115, %s116
    %s118 = ssub.s32 %s112, %s114
    %s119 = sor.u32 %s117, %s118
    %p120 = scmp.eq.s32.totalorder %s119, 0
    %s122 = sadd.s32 %s121, 1
    %s123 = scalar_select %p120, %s121, %s122
    %p126 = pneg %p120
    %p127 = scmp.eq.s32.totalorder %s13, 3
    %p128 = por %p126, %p127
    %p129 = scmp.ne.s32.totalorder %s121, %s124
    %p130 = scmp.eq.s32.totalorder %s13, 0
    %p131 = por %p129, %p130
    %p132 = scmp.ne.s32.totalorder %s121, %s124
    %p133 = scmp.eq.s32.totalorder %s18, 3
    %p134 = por %p132, %p133
    %p135 = scmp.ne.s32.totalorder %s124, %s125
    %p136 = scmp.eq.s32.totalorder %s18, 0
    %p137 = por %p135, %p136
    %p138 = scmp.ne.s32.totalorder %s124, %s125
    %p139 = scmp.eq.s32.totalorder %s19, 3
    %p140 = por %p138, %p139
    %p142 = scmp.ne.s32.totalorder %s125, %s141
    %p143 = scmp.eq.s32.totalorder %s19, 0
    %p144 = por %p142, %p143
    %s145 = ssub.s32 %s22, %s38
    %p146 = scmp.eq.s32.totalorder %s145, 0
    %s148 = sadd.s32 %s147, 1
    %s149 = scalar_select %p146, %s147, %s148
    %p152 = pneg %p146
    %p153 = scmp.eq.s32.totalorder %s13, 3
    %p154 = por %p152, %p153
    %p155 = scmp.ne.s32.totalorder %s147, %s150
    %p156 = scmp.eq.s32.totalorder %s13, 0
    %p157 = por %p155, %p156
    %p158 = scmp.ne.s32.totalorder %s147, %s150
    %p159 = scmp.eq.s32.totalorder %s18, 3
    %p160 = por %p158, %p159
    %p161 = scmp.ne.s32.totalorder %s150, %s151
    %p162 = scmp.eq.s32.totalorder %s18, 0
    %p163 = por %p161, %p162
    %p164 = scmp.ne.s32.totalorder %s150, %s151
    %p165 = scmp.eq.s32.totalorder %s19, 3
    %p166 = por %p164, %p165
    %p168 = scmp.ne.s32.totalorder %s151, %s167
    %p169 = scmp.eq.s32.totalorder %s19, 0
    %p170 = por %p168, %p169
    %s171 = ssub.s32 %s22, %s38
    %p172 = scmp.eq.s32.totalorder %s171, 0
    %s174 = sadd.s32 %s173, 1
    %s175 = scalar_select %p172, %s173, %s174
    %p178 = pneg %p172
    %p179 = scmp.eq.s32.totalorder %s13, 3
    %p180 = por %p178, %p179
    %p181 = scmp.ne.s32.totalorder %s173, %s176
    %p182 = scmp.eq.s32.totalorder %s13, 0
    %p183 = por %p181, %p182
    %p184 = scmp.ne.s32.totalorder %s173, %s176
    %p185 = scmp.eq.s32.totalorder %s18, 3
    %p186 = por %p184, %p185
    %p187 = scmp.ne.s32.totalorder %s176, %s177
    %p188 = scmp.eq.s32.totalorder %s18, 0
    %p189 = por %p187, %p188
    %p190 = scmp.ne.s32.totalorder %s176, %s177
    %p191 = scmp.eq.s32.totalorder %s19, 3
    %p192 = por %p190, %p191
    %p194 = scmp.ne.s32.totalorder %s177, %s193
    %p195 = scmp.eq.s32.totalorder %s19, 0
    %p196 = por %p194, %p195
    %p197 = scmp.lt.s32.totalorder %s23, %s22
    %s198 = scalar_select %p197, %s23, %s22
    %p199 = scmp.lt.s32.totalorder %s34, %s38
    %s200 = scalar_select %p199, %s34, %s38
    %s201 = ssub.s32 %s198, %s200
    %p202 = scmp.eq.s32.totalorder %s201, 0
    %s204 = sadd.s32 %s203, 1
    %s205 = scalar_select %p202, %s203, %s204
    %p208 = pneg %p202
    %p209 = scmp.eq.s32.totalorder %s13, 3
    %p210 = por %p208, %p209
    %p211 = scmp.ne.s32.totalorder %s203, %s206
    %p212 = scmp.eq.s32.totalorder %s13, 0
    %p213 = por %p211, %p212
    %p214 = scmp.ne.s32.totalorder %s203, %s206
    %p215 = scmp.eq.s32.totalorder %s18, 3
    %p216 = por %p214, %p215
    %p217 = scmp.ne.s32.totalorder %s206, %s207
    %p218 = scmp.eq.s32.totalorder %s18, 0
    %p219 = por %p217, %p218
    %p220 = scmp.ne.s32.totalorder %s206, %s207
    %p221 = scmp.eq.s32.totalorder %s19, 3
    %p222 = por %p220, %p221
    %p224 = scmp.ne.s32.totalorder %s207, %s223
    %p225 = scmp.eq.s32.totalorder %s19, 0
    %p226 = por %p224, %p225
    %p227 = scmp.lt.s32.totalorder %s23, %s22
    %s228 = scalar_select %p227, %s23, %s22
    %p229 = scmp.lt.s32.totalorder %s34, %s38
    %s230 = scalar_select %p229, %s34, %s38
    %s231 = ssub.s32 %s228, %s230
    %p232 = scmp.eq.s32.totalorder %s231, 0
    %s234 = sadd.s32 %s233, 1
    %s235 = scalar_select %p232, %s233, %s234
    %p238 = pneg %p232
    %p239 = scmp.eq.s32.totalorder %s13, 3
    %p240 = por %p238, %p239
    %p241 = scmp.ne.s32.totalorder %s233, %s236
    %p242 = scmp.eq.s32.totalorder %s13, 0
    %p243 = por %p241, %p242
    %p244 = scmp.ne.s32.totalorder %s233, %s236
    %p245 = scmp.eq.s32.totalorder %s18, 3
    %p246 = por %p244, %p245
    %p247 = scmp.ne.s32.totalorder %s236, %s237
    %p248 = scmp.eq.s32.totalorder %s18, 0
    %p249 = por %p247, %p248
    %p250 = scmp.ne.s32.totalorder %s236, %s237
    %p251 = scmp.eq.s32.totalorder %s19, 3
    %p252 = por %p250, %p251
    %p254 = scmp.ne.s32.totalorder %s237, %s253
    %p255 = scmp.eq.s32.totalorder %s19, 0
    %p256 = por %p254, %p255
    %s257 = ssub.s32 %s20, %s46
    %s258 = ssub.s32 %s21, %s42
    %s259 = sor.u32 %s257, %s258
    %s260 = ssub.s32 %s22, %s38
    %s261 = sor.u32 %s259, %s260
    %p262 = scmp.eq.s32.totalorder %s261, 0
    %s264 = sadd.s32 %s263, 1
    %s265 = scalar_select %p262, %s263, %s264
    %p268 = pneg %p262
    %p269 = scmp.eq.s32.totalorder %s13, 3
    %p270 = por %p268, %p269
    %p271 = scmp.ne.s32.totalorder %s263, %s266
    %p272 = scmp.eq.s32.totalorder %s13, 0
    %p273 = por %p271, %p272
    %p274 = scmp.ne.s32.totalorder %s263, %s266
    %p275 = scmp.eq.s32.totalorder %s18, 3
    %p276 = por %p274, %p275
    %p277 = scmp.ne.s32.totalorder %s266, %s267
    %p278 = scmp.eq.s32.totalorder %s18, 0
    %p279 = por %p277, %p278
    %p280 = scmp.ne.s32.totalorder %s266, %s267
    %p281 = scmp.eq.s32.totalorder %s19, 3
    %p282 = por %p280, %p281
    %p284 = scmp.ne.s32.totalorder %s267, %s283
    %p285 = scmp.eq.s32.totalorder %s19, 0
    %p286 = por %p284, %p285
    %p287 = scmp.le.s32.totalorder 1, %s13
    %p288 = scmp.lt.s32.totalorder %s13, 5
    %p289 = pnand %p287, %p288
    %p290 = pneg %p289
    // Predicated region
    $region9: #{transformer_block_forward.5} parent=5 // pred_check
      _
    $region10: #{transformer_block_forward.5} parent=5 // pred_check_branch
      %292 = sbr.rel (%p289) target = $region12
    $region11: #{transformer_block_forward.5} parent=5 // pred_region
      %s293 = ssub.s32 %s13, 1
      // Predicated region
      $region13: #{transformer_block_forward.5} parent=11 // pred_check
        %p294 = pneg %p163
      $region14: #{transformer_block_forward.5} parent=11 // pred_check_branch
        %296 = sbr.rel (%p294) target = $region16
      $region15: #{transformer_block_forward.5} parent=11 // pred_region
        %p297 = scmp.lt.s32.totalorder %s26, 0
        %s298 = scalar_select %p297, %s26, 0
        %s299 = smul.addr %s298, 8
        %s300 = scalar_lea.vmem %s3, %s299
      $region16: #{transformer_block_forward.5} parent=11 // pred_fallthru
        _
      // Predicated region
      $region17: #{transformer_block_forward.5} parent=11 // pred_check
        %p301 = pneg %p189
      $region18: #{transformer_block_forward.5} parent=11 // pred_check_branch
        %303 = sbr.rel (%p301) target = $region20
      $region19: #{transformer_block_forward.5} parent=11 // pred_region
        %p304 = scmp.lt.s32.totalorder %s26, 0
        %s305 = scalar_select %p304, %s26, 0
        %s306 = smul.addr %s305, 8
        %s307 = scalar_lea.vmem %s4, %s306
      $region20: #{transformer_block_forward.5} parent=11 // pred_fallthru
        _
      // Predicated region
      $region21: #{transformer_block_forward.5} parent=11 // pred_check
        %p308 = pneg %p219
      $region22: #{transformer_block_forward.5} parent=11 // pred_check_branch
        %310 = sbr.rel (%p308) target = $region24
      $region23: #{transformer_block_forward.5} parent=11 // pred_region
        %p311 = scmp.lt.s32.totalorder %s27, %s26
        %s312 = scalar_select %p311, %s27, %s26
        %p313 = scmp.lt.s32.totalorder %s312, 0
        %s314 = scalar_select %p313, %s312, 0
        %s315 = smul.addr %s314, 8
        %s316 = scalar_lea.vmem %s5, %s315
        %p317 = scmp.lt.s32.totalorder %s27, %s26
        %s318 = scalar_select %p317, %s27, %s26
      $region24: #{transformer_block_forward.5} parent=11 // pred_fallthru
        _
      // Predicated region
      $region25: #{transformer_block_forward.5} parent=11 // pred_check
        %p319 = pneg %p249
      $region26: #{transformer_block_forward.5} parent=11 // pred_check_branch
        %321 = sbr.rel (%p319) target = $region28
      $region27: #{transformer_block_forward.5} parent=11 // pred_region
        %p322 = scmp.lt.s32.totalorder %s27, %s26
        %s323 = scalar_select %p322, %s27, %s26
        %p324 = scmp.lt.s32.totalorder %s323, 0
        %s325 = scalar_select %p324, %s323, 0
        %s326 = smul.addr %s325, 8
        %s327 = scalar_lea.vmem %s6, %s326
        %p328 = scmp.lt.s32.totalorder %s27, %s26
        %s329 = scalar_select %p328, %s27, %s26
      $region28: #{transformer_block_forward.5} parent=11 // pred_fallthru
        _
    $region12: #{transformer_block_forward.5} parent=5 // pred_fallthru
      _
    %p330 = scmp.lt.s32.totalorder %s13, 4
    // Predicated region
    $region29: #{transformer_block_forward.5} parent=5 // pred_check
      %p331 = pneg %p330
    $region30: #{transformer_block_forward.5} parent=5 // pred_check_branch
      %333 = sbr.rel (%p331) target = $region32
    $region31: #{transformer_block_forward.5} parent=5 // pred_region
      // Predicated region
      $region33: #{transformer_block_forward.5} parent=31 // pred_check
        %p334 = pneg %p63
      $region34: #{transformer_block_forward.5} parent=31 // pred_check_branch
        %336 = sbr.rel (%p334) target = $region36
      $region35: #{transformer_block_forward.5} parent=31 // pred_region
        %s337 = smul.u32 2, %s21
        %p338 = scmp.lt.s32.totalorder %s20, 1
        %s339 = scalar_select %p338, %s20, 1
        %p340 = scmp.lt.s32.totalorder %s337, 3
        %s341 = scalar_select %p340, %s337, 3
        %p342 = scmp.lt.s32.totalorder %s22, 0
        %s343 = scalar_select %p342, %s22, 0
        %s344 = sadd.s32 %s343, %s341
        %s345 = smul.addr %s339, 4
        %s346 = sadd.s32 %s344, %s345
        %s347 = smul.addr %s346, 4
        %s348 = scalar_lea.vmem %s0, %s347
        %s349 = smul.u32 2, %s21
      $region36: #{transformer_block_forward.5} parent=31 // pred_fallthru
        _
      // Predicated region
      $region37: #{transformer_block_forward.5} parent=31 // pred_check
        %p350 = pneg %p97
      $region38: #{transformer_block_forward.5} parent=31 // pred_check_branch
        %352 = sbr.rel (%p350) target = $region40
      $region39: #{transformer_block_forward.5} parent=31 // pred_region
        %p353 = scmp.lt.s32.totalorder %s23, %s22
        %s354 = scalar_select %p353, %s23, %s22
        %p355 = scmp.lt.s32.totalorder %s20, 1
        %s356 = scalar_select %p355, %s20, 1
        %p357 = scmp.lt.s32.totalorder %s21, 1
        %s358 = scalar_select %p357, %s21, 1
        %p359 = scmp.lt.s32.totalorder %s354, 0
        %s360 = scalar_select %p359, %s354, 0
        %s361 = sadd.s32 %s360, %s358
        %s362 = smul.addr %s356, 2
        %s363 = sadd.s32 %s361, %s362
        %s364 = smul.addr %s363, 4
        %s365 = scalar_lea.vmem %s1, %s364
        %p366 = scmp.lt.s32.totalorder %s23, %s22
        %s367 = scalar_select %p366, %s23, %s22
      $region40: #{transformer_block_forward.5} parent=31 // pred_fallthru
        _
      // Predicated region
      $region41: #{transformer_block_forward.5} parent=31 // pred_check
        %p368 = pneg %p131
      $region42: #{transformer_block_forward.5} parent=31 // pred_check_branch
        %370 = sbr.rel (%p368) target = $region44
      $region43: #{transformer_block_forward.5} parent=31 // pred_region
        %p371 = scmp.lt.s32.totalorder %s23, %s22
        %s372 = scalar_select %p371, %s23, %s22
        %p373 = scmp.lt.s32.totalorder %s20, 1
        %s374 = scalar_select %p373, %s20, 1
        %p375 = scmp.lt.s32.totalorder %s21, 1
        %s376 = scalar_select %p375, %s21, 1
        %p377 = scmp.lt.s32.totalorder %s372, 0
        %s378 = scalar_select %p377, %s372, 0
        %s379 = sadd.s32 %s378, %s376
        %s380 = smul.addr %s374, 2
        %s381 = sadd.s32 %s379, %s380
        %s382 = smul.addr %s381, 4
        %s383 = scalar_lea.vmem %s2, %s382
        %p384 = scmp.lt.s32.totalorder %s23, %s22
        %s385 = scalar_select %p384, %s23, %s22
      $region44: #{transformer_block_forward.5} parent=31 // pred_fallthru
        _
    $region32: #{transformer_block_forward.5} parent=5 // pred_fallthru
      _
    %p386 = scmp.le.s32.totalorder 1, %s13
    %p387 = scmp.lt.s32.totalorder %s13, 5
    %p388 = pnand %p386, %p387
    %p389 = pneg %p388
    // Predicated region
    $region45: #{transformer_block_forward.5} parent=5 // pred_check
      _
    $region46: #{transformer_block_forward.5} parent=5 // pred_check_branch
      %391 = sbr.rel (%p388) target = $region48
    $region47: #{transformer_block_forward.5} parent=5 // pred_region
      %s392 = ssub.s32 %s13, 1
      %s393 = smul.u32 2, %s25
      %p394 = scmp.lt.s32.totalorder %s24, 1
      %s395 = scalar_select %p394, %s24, 1
      %p396 = scmp.lt.s32.totalorder %s393, 3
      %s397 = scalar_select %p396, %s393, 3
      %p398 = scmp.lt.s32.totalorder %s26, 0
      %s399 = scalar_select %p398, %s26, 0
      %s400 = sadd.s32 %s399, %s397
      %s401 = smul.addr %s395, 4
      %s402 = sadd.s32 %s400, %s401
      %s403 = smul.addr %s402, 4
      %s404 = scalar_lea.vmem %s0, %s403
      %p405 = pneg %p69
      %p406 = pneg %p66
      %p407 = scmp.lt.s32.totalorder %s27, %s26
      %s408 = scalar_select %p407, %s27, %s26
      %p409 = scmp.lt.s32.totalorder %s24, 1
      %s410 = scalar_select %p409, %s24, 1
      %p411 = scmp.lt.s32.totalorder %s25, 1
      %s412 = scalar_select %p411, %s25, 1
      %p413 = scmp.lt.s32.totalorder %s408, 0
      %s414 = scalar_select %p413, %s408, 0
      %s415 = sadd.s32 %s414, %s412
      %s416 = smul.addr %s410, 2
      %s417 = sadd.s32 %s415, %s416
      %s418 = smul.addr %s417, 4
      %s419 = scalar_lea.vmem %s1, %s418
      %p420 = pneg %p103
      %p421 = pneg %p100
      %p422 = scmp.lt.s32.totalorder %s27, %s26
      %s423 = scalar_select %p422, %s27, %s26
      %p424 = scmp.lt.s32.totalorder %s24, 1
      %s425 = scalar_select %p424, %s24, 1
      %p426 = scmp.lt.s32.totalorder %s25, 1
      %s427 = scalar_select %p426, %s25, 1
      %p428 = scmp.lt.s32.totalorder %s423, 0
      %s429 = scalar_select %p428, %s423, 0
      %s430 = sadd.s32 %s429, %s427
      %s431 = smul.addr %s425, 2
      %s432 = sadd.s32 %s430, %s431
      %s433 = smul.addr %s432, 4
      %s434 = scalar_lea.vmem %s2, %s433
      %p435 = pneg %p137
      %p436 = pneg %p134
      %p437 = scmp.lt.s32.totalorder %s26, 0
      %s438 = scalar_select %p437, %s26, 0
      %s439 = smul.addr %s438, 8
      %s440 = scalar_lea.vmem %s3, %s439
      %p441 = pneg %p163
      %p442 = pneg %p160
      %p443 = scmp.lt.s32.totalorder %s26, 0
      %s444 = scalar_select %p443, %s26, 0
      %s445 = smul.addr %s444, 8
      %s446 = scalar_lea.vmem %s4, %s445
      %p447 = pneg %p189
      %p448 = pneg %p186
      %p449 = scmp.lt.s32.totalorder %s27, %s26
      %s450 = scalar_select %p449, %s27, %s26
      %p451 = scmp.lt.s32.totalorder %s450, 0
      %s452 = scalar_select %p451, %s450, 0
      %s453 = smul.addr %s452, 8
      %s454 = scalar_lea.vmem %s5, %s453
      %p455 = pneg %p219
      %p456 = pneg %p216
      %p457 = scmp.lt.s32.totalorder %s27, %s26
      %s458 = scalar_select %p457, %s27, %s26
      %p459 = scmp.lt.s32.totalorder %s458, 0
      %s460 = scalar_select %p459, %s458, 0
      %s461 = smul.addr %s460, 8
      %s462 = scalar_lea.vmem %s6, %s461
      %p463 = pneg %p249
      %p464 = pneg %p246
      %p465 = pneg %p279
      %p466 = pneg %p276
      %s467 = smul.u32 2, %s25
      %p468 = scmp.lt.s32.totalorder %s24, 1
      %s469 = scalar_select %p468, %s24, 1
      %p470 = scmp.lt.s32.totalorder %s467, 3
      %s471 = scalar_select %p470, %s467, 3
      %p472 = scmp.lt.s32.totalorder %s26, 0
      %s473 = scalar_select %p472, %s26, 0
      %s474 = sadd.s32 %s473, %s471
      %s475 = smul.addr %s469, 4
      %s476 = sadd.s32 %s474, %s475
      %s477 = smul.addr %s476, 4
      %s478 = scalar_lea.vmem %s7, %s477
      %s479 = smul.u32 2, %s25
      %p480 = scmp.lt.s32.totalorder %s24, 1
      %s481 = scalar_select %p480, %s24, 1
      %p482 = scmp.lt.s32.totalorder %s479, 3
      %s483 = scalar_select %p482, %s479, 3
      %p484 = scmp.lt.s32.totalorder %s26, 0
      %s485 = scalar_select %p484, %s26, 0
      %s486 = sadd.s32 %s485, %s483
      %s487 = smul.addr %s481, 4
      %s488 = sadd.s32 %s486, %s487
      %s489 = smul.addr %s488, 4
      %s490 = scalar_lea.vmem %s0, %s489
      %s491 = smul.u32 2, %s25
      %p492 = scmp.lt.s32.totalorder %s27, %s26
      %s493 = scalar_select %p492, %s27, %s26
      %p494 = scmp.lt.s32.totalorder %s24, 1
      %s495 = scalar_select %p494, %s24, 1
      %p496 = scmp.lt.s32.totalorder %s25, 1
      %s497 = scalar_select %p496, %s25, 1
      %p498 = scmp.lt.s32.totalorder %s493, 0
      %s499 = scalar_select %p498, %s493, 0
      %s500 = sadd.s32 %s499, %s497
      %s501 = smul.addr %s495, 2
      %s502 = sadd.s32 %s500, %s501
      %s503 = smul.addr %s502, 4
      %s504 = scalar_lea.vmem %s1, %s503
      %p505 = scmp.lt.s32.totalorder %s27, %s26
      %s506 = scalar_select %p505, %s27, %s26
      %p507 = scmp.lt.s32.totalorder %s27, %s26
      %s508 = scalar_select %p507, %s27, %s26
      %p509 = scmp.lt.s32.totalorder %s24, 1
      %s510 = scalar_select %p509, %s24, 1
      %p511 = scmp.lt.s32.totalorder %s25, 1
      %s512 = scalar_select %p511, %s25, 1
      %p513 = scmp.lt.s32.totalorder %s508, 0
      %s514 = scalar_select %p513, %s508, 0
      %s515 = sadd.s32 %s514, %s512
      %s516 = smul.addr %s510, 2
      %s517 = sadd.s32 %s515, %s516
      %s518 = smul.addr %s517, 4
      %s519 = scalar_lea.vmem %s2, %s518
      %p520 = scmp.lt.s32.totalorder %s27, %s26
      %s521 = scalar_select %p520, %s27, %s26
      %p522 = scmp.lt.s32.totalorder %s26, 0
      %s523 = scalar_select %p522, %s26, 0
      %s524 = smul.addr %s523, 8
      %s525 = scalar_lea.vmem %s3, %s524
      %p526 = scmp.lt.s32.totalorder %s26, 0
      %s527 = scalar_select %p526, %s26, 0
      %s528 = smul.addr %s527, 8
      %s529 = scalar_lea.vmem %s4, %s528
      %p530 = scmp.lt.s32.totalorder %s27, %s26
      %s531 = scalar_select %p530, %s27, %s26
      %p532 = scmp.lt.s32.totalorder %s531, 0
      %s533 = scalar_select %p532, %s531, 0
      %s534 = smul.addr %s533, 8
      %s535 = scalar_lea.vmem %s5, %s534
      %p536 = scmp.lt.s32.totalorder %s27, %s26
      %s537 = scalar_select %p536, %s27, %s26
      %p538 = scmp.lt.s32.totalorder %s27, %s26
      %s539 = scalar_select %p538, %s27, %s26
      %p540 = scmp.lt.s32.totalorder %s539, 0
      %s541 = scalar_select %p540, %s539, 0
      %s542 = smul.addr %s541, 8
      %s543 = scalar_lea.vmem %s6, %s542
      %p544 = scmp.lt.s32.totalorder %s27, %s26
      %s545 = scalar_select %p544, %s27, %s26
      %s546 = smul.u32 2, %s25
      %p547 = scmp.lt.s32.totalorder %s24, 1
      %s548 = scalar_select %p547, %s24, 1
      %p549 = scmp.lt.s32.totalorder %s546, 3
      %s550 = scalar_select %p549, %s546, 3
      %p551 = scmp.lt.s32.totalorder %s26, 0
      %s552 = scalar_select %p551, %s26, 0
      %s553 = sadd.s32 %s552, %s550
      %s554 = smul.addr %s548, 4
      %s555 = sadd.s32 %s553, %s554
      %s556 = smul.addr %s555, 4
      %s557 = scalar_lea.vmem %s7, %s556
      %s558 = smul.u32 2, %s25
      %p560 = scmp.eq.s32.totalorder %s27, 0
      // Predicated region
      $region49: #{transformer_block_forward.5} parent=47 // pred_check
        %p561 = pneg %p560
      $region50: #{transformer_block_forward.5} parent=47 // pred_check_branch
        %563 = sbr.rel (%p561) target = $region52
      $region51: #{transformer_block_forward.5} parent=47 // pred_region
        %v564 = vld [vmem:[%s490] sm:$0xf]
        %v565 = vld [vmem:[%s490 + $0x4] sm:$0xf]
        %v566 = vunpack.c.l.bf16 %v564
        %v567 = vunpack.c.l.bf16 %v565
        %v568 = vld [vmem:[%s525] sm:$0xff]
        %v569 = vld [vmem:[%s529] sm:$0xff]
        %v570 = vmul.f32 %v566, %v568
        %v571 = vmul.f32 %v567, %v568
        %v572 = vsub.f32 0.0, %v566
        %v573 = vsub.f32 0.0, %v567
        %576 = vrot.lane.b32.xlu0 %v572, 124
        %v577 = vpop.permute.xlu0 %576
        %578 = vrot.lane.b32.xlu0 %v573, 124
        %v579 = vpop.permute.xlu0 %578
        %584 = vrot.lane.b32.xlu0 %v566, 4
        %v585 = vpop.permute.xlu0 %584
        %586 = vrot.lane.b32.xlu0 %v567, 4
        %v587 = vpop.permute.xlu0 %586
        %vm590 = vcmask 31744
        %v591 = vsel %vm590, %v577, %v585
        %v592 = vsel %vm590, %v579, %v587
        %v593 = vmul.f32 %v591, %v569
        %v594 = vmul.f32 %v592, %v569
        %v595 = vadd.f32 %v570, %v593
        %v596 = vadd.f32 %v571, %v594
        %v597 = vmul.f32 %v595, 0.35355338
        %v598 = vmul.f32 %v596, 0.35355338
        %v599 = vpack.c.bf16 %v598, %v597
        %v601 = vunpack.c.l.b16 %v599
        %v602 = vunpack.c.h.b16 %v599
        %v603 = vpack.c.b16 %v601, %v601
        %v604 = vpack.c.b16 %v602, %v602
        %vm607 = vcmask 60416
        %608 = vst.msk [vmem:[#allocation2] sm:$0xf] %vm607, %v603
        %609 = vst.msk [vmem:[#allocation2 + $0x4] sm:$0xf] %vm607, %v604
        %vm610 = vcmask 7168
        %611 = vst.msk [vmem:[#allocation3] sm:$0xff] %vm610, -1e+30
        %612 = vst.msk [vmem:[#allocation3 + $0x8] sm:$0xff] %vm610, -1e+30
        %613 = vst.msk [vmem:[#allocation4] sm:$0xff] %vm610, 0.0
        %614 = vst.msk [vmem:[#allocation4 + $0x8] sm:$0xff] %vm610, 0.0
        %vm615 = vcmask 64512
        %616 = vst.msk [vmem:[#allocation5] sm:$0xff] %vm615, 0.0
        %617 = vst.msk [vmem:[#allocation5 + $0x8] sm:$0xff] %vm615, 0.0
      $region52: #{transformer_block_forward.5} parent=47 // pred_fallthru
        _
      %p618 = scmp.lt.s32.totalorder %s27, %s26
      // Predicated region
      $region53: #{transformer_block_forward.5} parent=47 // pred_check
        %p619 = pneg %p618
      $region54: #{transformer_block_forward.5} parent=47 // pred_check_branch
        %621 = sbr.rel (%p619) target = $region56
      $region55: #{transformer_block_forward.5} parent=47 // pred_region
        %v622 = vld [vmem:[%s504] sm:$0xf]
        %v623 = vunpack.c.l.bf16 %v622
        %v624 = vld [vmem:[%s535] sm:$0xff]
        %v625 = vmul.f32 %v623, %v624
        %v626 = vsub.f32 0.0, %v623
        %628 = vrot.lane.b32.xlu0 %v626, 124
        %v629 = vpop.permute.xlu0 %628
        %632 = vrot.lane.b32.xlu0 %v623, 4
        %v633 = vpop.permute.xlu0 %632
        %vm635 = vcmask 31744
        %v636 = vsel %vm635, %v629, %v633
        %v637 = vld [vmem:[%s543] sm:$0xff]
        %v638 = vmul.f32 %v636, %v637
        %v639 = vadd.f32 %v625, %v638
        %v640 = vpack.c.bf16 %v639, %v639
        %v641 = vld [vmem:[%s519] sm:$0xf]
        %v642 = vld [vmem:[#allocation2] sm:$0xf]
        %v643 = vld [vmem:[#allocation2 + $0x4] sm:$0xf]
        %v646 = vunpack.c.l.b16 %v642
        %v647 = vunpack.c.l.b16 %v643
        %v648 = vpack.c.b16 %v647, %v646
        %vm649 = vcmask 64512
        %v651 = vsel %vm649, %v648, 0
        %v654 = vsel %vm649, %v640, 0
        %656 = vmatprep.subr.bf16.mxu0 0
        %657 = vmatpush1.bf16.xpose.msra.mxu0 0
        %658 = vmatprep.subr.bf16.mxu0 0
        %659 = vmatpush1.bf16.xpose.msra.mxu0 0
        %660 = vmatprep.subr.bf16.mxu0 0
        %661 = vmatpush1.bf16.xpose.msra.mxu0 0
        %662 = vmatprep.subr.bf16.mxu0 0
        %663 = vmatpush1.bf16.xpose.msra.mxu0 0
        %664 = vmatprep.subr.bf16.mxu0 0
        %665 = vmatpush1.bf16.xpose.msra.mxu0 0
        %666 = vmatprep.subr.bf16.mxu0 0
        %667 = vmatpush1.bf16.xpose.msra.mxu0 0
        %668 = vmatprep.subr.bf16.mxu0 0
        %669 = vmatpush1.bf16.xpose.msra.mxu0 0
        %670 = vmatprep.subr.bf16.mxu0 0
        %671 = vmatpush1.bf16.xpose.msra.mxu0 %v654
        %672 = vmatprep.subr.bf16.mxu0 0
        %673 = vmatpush2.bf16.xpose.msra.mxu0 0
        %674 = vmatprep.subr.bf16.mxu0 0
        %675 = vmatpush2.bf16.xpose.msra.mxu0 0
        %676 = vmatprep.subr.bf16.mxu0 0
        %677 = vmatpush2.bf16.xpose.msra.mxu0 0
        %678 = vmatprep.subr.bf16.mxu0 0
        %679 = vmatpush2.bf16.xpose.msra.mxu0 0
        %680 = vmatprep.subr.bf16.mxu0 0
        %681 = vmatpush2.bf16.xpose.msra.mxu0 0
        %682 = vmatprep.subr.bf16.mxu0 0
        %683 = vmatpush2.bf16.xpose.msra.mxu0 0
        %684 = vmatprep.subr.bf16.mxu0 0
        %685 = vmatpush2.bf16.xpose.msra.mxu0 0
        %686 = vmatprep.subr.bf16.mxu0 0
        %687 = vmatpush2.bf16.xpose.msra.mxu0 0
        %688 = vmatprep.mubr.bf16.mxu0 0
        %689 = vmatmul.mubr.bf16.gmra.mxu0 %v651
        %v690 = vpop.f32.mrf.mxu0
        %v691 = vadd.f32 0.0, %v690
        %v692 = vpop.f32.mrf.mxu0
        %v693 = vpop.f32.mrf.mxu0
        %v694 = vadd.f32 0.0, %v693
        %v695 = vpop.f32.mrf.mxu0
        %696 = vdwg.mxu0
        %v697 = vld [vmem:[#allocation3] sm:$0xff]
        %v698 = vld [vmem:[#allocation3 + $0x8] sm:$0xff]
        %v699 = vsel %vm649, %v691, -inf
        %700 = vmax.xlane.f32.xlu0 %v699
        %v701 = vpop.xlane.xlu0 %700
        %v702 = vsel %vm649, %v694, -inf
        %703 = vmax.xlane.f32.xlu0 %v702
        %v704 = vpop.xlane.xlu0 %703
        %v705 = vmax.f32 %v697, %v701
        %v706 = vmax.f32 %v698, %v704
        %v707 = vsub.f32 %v697, %v705
        %v708 = vsub.f32 %v698, %v706
        %v709 = vmul.f32 %v707, 1.442695
        %v710 = vpow.pop %v709
        %v711 = vmul.f32 %v708, 1.442695
        %v712 = vpow.pop %v711
        %714 = vset.pattern.permute.xlu0 0
        %715 = vperm.xlu0 %714, %v705
        %v716 = vpop.permute.xlu0 %715
        %719 = vset.pattern.permute.xlu0 0
        %720 = vperm.xlu0 %719, %v706
        %v721 = vpop.permute.xlu0 %720
        %v723 = vsub.f32 %v691, %v716
        %v724 = vsub.f32 %v694, %v721
        %v725 = vmul.f32 %v723, 1.442695
        %v726 = vpow.pop %v725
        %v727 = vmul.f32 %v724, 1.442695
        %v728 = vpow.pop %v727
        %v729 = vld [vmem:[#allocation4] sm:$0xff]
        %v730 = vld [vmem:[#allocation4 + $0x8] sm:$0xff]
        %v731 = vmul.f32 %v710, %v729
        %v732 = vmul.f32 %v712, %v730
        %v733 = vsel %vm649, %v726, 0.0
        %734 = vadd.xlane.f32.xlu0 %v733
        %v735 = vpop.xlane.xlu0 %734
        %v736 = vsel %vm649, %v728, 0.0
        %737 = vadd.xlane.f32.xlu0 %v736
        %v738 = vpop.xlane.xlu0 %737
        %v739 = vadd.f32 %v731, %v735
        %v740 = vadd.f32 %v732, %v738
        %vm741 = vcmask 7168
        %742 = vst.msk [vmem:[#allocation4] sm:$0xff] %vm741, %v739
        %743 = vst.msk [vmem:[#allocation4 + $0x8] sm:$0xff] %vm741, %v740
        %v744 = vld [vmem:[#allocation5] sm:$0xff]
        %v745 = vld [vmem:[#allocation5 + $0x8] sm:$0xff]
        %747 = vset.pattern.permute.xlu0 0
        %748 = vperm.xlu0 %747, %v710
        %v749 = vpop.permute.xlu0 %748
        %752 = vset.pattern.permute.xlu0 0
        %753 = vperm.xlu0 %752, %v712
        %v754 = vpop.permute.xlu0 %753
        %v756 = vmul.f32 %v749, %v744
        %v757 = vmul.f32 %v754, %v745
        %v758 = vpack.c.bf16 %v728, %v726
        %v760 = vsel %vm649, %v758, 0
        %vm762 = vcmask 1043456
        %v764 = vsel %vm762, %v641, 0
        %766 = vmatprep.subr.bf16.mxu0 0
        %767 = vmatpush1.bf16.msra.mxu0 0
        %768 = vmatprep.subr.bf16.mxu0 0
        %769 = vmatpush1.bf16.msra.mxu0 0
        %770 = vmatprep.subr.bf16.mxu0 0
        %771 = vmatpush1.bf16.msra.mxu0 0
        %772 = vmatprep.subr.bf16.mxu0 0
        %773 = vmatpush1.bf16.msra.mxu0 0
        %774 = vmatprep.subr.bf16.mxu0 0
        %775 = vmatpush1.bf16.msra.mxu0 0
        %776 = vmatprep.subr.bf16.mxu0 0
        %777 = vmatpush1.bf16.msra.mxu0 0
        %778 = vmatprep.subr.bf16.mxu0 0
        %779 = vmatpush1.bf16.msra.mxu0 0
        %780 = vmatprep.subr.bf16.mxu0 0
        %781 = vmatpush1.bf16.msra.mxu0 %v764
        %782 = vmatprep.subr.bf16.mxu0 0
        %783 = vmatpush2.bf16.msra.mxu0 0
        %784 = vmatprep.subr.bf16.mxu0 0
        %785 = vmatpush2.bf16.msra.mxu0 0
        %786 = vmatprep.subr.bf16.mxu0 0
        %787 = vmatpush2.bf16.msra.mxu0 0
        %788 = vmatprep.subr.bf16.mxu0 0
        %789 = vmatpush2.bf16.msra.mxu0 0
        %790 = vmatprep.subr.bf16.mxu0 0
        %791 = vmatpush2.bf16.msra.mxu0 0
        %792 = vmatprep.subr.bf16.mxu0 0
        %793 = vmatpush2.bf16.msra.mxu0 0
        %794 = vmatprep.subr.bf16.mxu0 0
        %795 = vmatpush2.bf16.msra.mxu0 0
        %796 = vmatprep.subr.bf16.mxu0 0
        %797 = vmatpush2.bf16.msra.mxu0 0
        %798 = vmatprep.mubr.bf16.mxu0 0
        %799 = vmatmul.mubr.bf16.gmra.mxu0 %v760
        %v800 = vpop.f32.mrf.mxu0
        %v801 = vadd.f32 0.0, %v800
        %v802 = vpop.f32.mrf.mxu0
        %v803 = vpop.f32.mrf.mxu0
        %v804 = vadd.f32 0.0, %v803
        %v805 = vpop.f32.mrf.mxu0
        %806 = vdwg.mxu0
        %v807 = vadd.f32 %v756, %v801
        %v808 = vadd.f32 %v757, %v804
        %809 = vst.msk [vmem:[#allocation5] sm:$0xff] %vm649, %v807
        %810 = vst.msk [vmem:[#allocation5 + $0x8] sm:$0xff] %vm649, %v808
        %811 = vst.msk [vmem:[#allocation3] sm:$0xff] %vm741, %v705
        %812 = vst.msk [vmem:[#allocation3 + $0x8] sm:$0xff] %vm741, %v706
      $region56: #{transformer_block_forward.5} parent=47 // pred_fallthru
        _
      %p813 = scmp.eq.s32.totalorder %s27, %s26
      // Predicated region
      $region57: #{transformer_block_forward.5} parent=47 // pred_check
        %p814 = pneg %p813
      $region58: #{transformer_block_forward.5} parent=47 // pred_check_branch
        %816 = sbr.rel (%p814) target = $region60
      $region59: #{transformer_block_forward.5} parent=47 // pred_region
        %v817 = vld [vmem:[%s504] sm:$0xf]
        %v818 = vunpack.c.l.bf16 %v817
        %v819 = vld [vmem:[%s535] sm:$0xff]
        %v820 = vmul.f32 %v818, %v819
        %v821 = vsub.f32 0.0, %v818
        %823 = vrot.lane.b32.xlu0 %v821, 124
        %v824 = vpop.permute.xlu0 %823
        %827 = vrot.lane.b32.xlu0 %v818, 4
        %v828 = vpop.permute.xlu0 %827
        %vm830 = vcmask 31744
        %v831 = vsel %vm830, %v824, %v828
        %v832 = vld [vmem:[%s543] sm:$0xff]
        %v833 = vmul.f32 %v831, %v832
        %v834 = vadd.f32 %v820, %v833
        %v835 = vpack.c.bf16 %v834, %v834
        %v836 = vld [vmem:[%s519] sm:$0xf]
        %v837 = vld [vmem:[#allocation2] sm:$0xf]
        %v838 = vld [vmem:[#allocation2 + $0x4] sm:$0xf]
        %v841 = vunpack.c.l.b16 %v837
        %v842 = vunpack.c.l.b16 %v838
        %v843 = vpack.c.b16 %v842, %v841
        %vm844 = vcmask 64512
        %v846 = vsel %vm844, %v843, 0
        %v849 = vsel %vm844, %v835, 0
        %851 = vmatprep.subr.bf16.mxu0 0
        %852 = vmatpush1.bf16.xpose.msra.mxu0 0
        %853 = vmatprep.subr.bf16.mxu0 0
        %854 = vmatpush1.bf16.xpose.msra.mxu0 0
        %855 = vmatprep.subr.bf16.mxu0 0
        %856 = vmatpush1.bf16.xpose.msra.mxu0 0
        %857 = vmatprep.subr.bf16.mxu0 0
        %858 = vmatpush1.bf16.xpose.msra.mxu0 0
        %859 = vmatprep.subr.bf16.mxu0 0
        %860 = vmatpush1.bf16.xpose.msra.mxu0 0
        %861 = vmatprep.subr.bf16.mxu0 0
        %862 = vmatpush1.bf16.xpose.msra.mxu0 0
        %863 = vmatprep.subr.bf16.mxu0 0
        %864 = vmatpush1.bf16.xpose.msra.mxu0 0
        %865 = vmatprep.subr.bf16.mxu0 0
        %866 = vmatpush1.bf16.xpose.msra.mxu0 %v849
        %867 = vmatprep.subr.bf16.mxu0 0
        %868 = vmatpush2.bf16.xpose.msra.mxu0 0
        %869 = vmatprep.subr.bf16.mxu0 0
        %870 = vmatpush2.bf16.xpose.msra.mxu0 0
        %871 = vmatprep.subr.bf16.mxu0 0
        %872 = vmatpush2.bf16.xpose.msra.mxu0 0
        %873 = vmatprep.subr.bf16.mxu0 0
        %874 = vmatpush2.bf16.xpose.msra.mxu0 0
        %875 = vmatprep.subr.bf16.mxu0 0
        %876 = vmatpush2.bf16.xpose.msra.mxu0 0
        %877 = vmatprep.subr.bf16.mxu0 0
        %878 = vmatpush2.bf16.xpose.msra.mxu0 0
        %879 = vmatprep.subr.bf16.mxu0 0
        %880 = vmatpush2.bf16.xpose.msra.mxu0 0
        %881 = vmatprep.subr.bf16.mxu0 0
        %882 = vmatpush2.bf16.xpose.msra.mxu0 0
        %883 = vmatprep.mubr.bf16.mxu0 0
        %884 = vmatmul.mubr.bf16.gmra.mxu0 %v846
        %v885 = vpop.f32.mrf.mxu0
        %v886 = vadd.f32 0.0, %v885
        %v887 = vpop.f32.mrf.mxu0
        %v888 = vpop.f32.mrf.mxu0
        %v889 = vadd.f32 0.0, %v888
        %v890 = vpop.f32.mrf.mxu0
        %891 = vdwg.mxu0
        %s892 = smul.u32 %s26, 8
        %v893 = vlaneseq
        %v894 = vshrl.u32 %v893, 7
        %v895 = vadd.s32 %v894, 8
        %vm896 = vcmp.lt.s32.totalorder %v894, 0
        %v897 = vsub.s32 0, %v894
        %v898 = vsel %vm896, %v897, %v894
        %v899 = vshrl.u32 %v898, 3
        %v900 = vand.u32 %v898, 7
        %v901 = vsub.s32 0, %v900
        %v902 = vsel %vm896, %v901, %v900
        %vm903 = vcmp.lt.s32.totalorder %v895, 0
        %v904 = vsub.s32 0, %v895
        %v905 = vsel %vm903, %v904, %v895
        %v906 = vshrl.u32 %v905, 3
        %v907 = vand.u32 %v905, 7
        %v908 = vsub.s32 0, %v907
        %v909 = vsel %vm903, %v908, %v907
        %vm910 = vcmp.ne.s32.totalorder %v902, 0
        %vm911 = vcmp.ne.s32.totalorder %v909, 0
        %vm912 = vcmp.lt.s32.totalorder %v902, 0
        %vm913 = vcmp.lt.s32.totalorder %v909, 0
        %vm914 = vmand %vm912, %vm910
        %vm915 = vmand %vm913, %vm911
        %v916 = vadd.s32 %v902, 8
        %v917 = vadd.s32 %v909, 8
        %v918 = vsel %vm914, %v916, %v902
        %v919 = vsel %vm915, %v917, %v909
        %v920 = vstv %s892
        %v921 = vadd.s32 %v920, %v918
        %v922 = vadd.s32 %v920, %v919
        %s923 = smul.u32 %s27, 8
        %v924 = vlaneseq
        %v925 = vand.u32 %v924, 127
        %v926 = vstv %s923
        %v927 = vadd.s32 %v926, %v925
        %vm928 = vcmp.le.s32.totalorder %v927, %v921
        %vm929 = vcmp.le.s32.totalorder %v927, %v922
        %v930 = vsel %vm928, %v886, -1e+30
        %v931 = vsel %vm929, %v889, -1e+30
        %v932 = vld [vmem:[#allocation3] sm:$0xff]
        %v933 = vld [vmem:[#allocation3 + $0x8] sm:$0xff]
        %v934 = vsel %vm844, %v930, -inf
        %935 = vmax.xlane.f32.xlu0 %v934
        %v936 = vpop.xlane.xlu0 %935
        %v937 = vsel %vm844, %v931, -inf
        %938 = vmax.xlane.f32.xlu0 %v937
        %v939 = vpop.xlane.xlu0 %938
        %v940 = vmax.f32 %v932, %v936
        %v941 = vmax.f32 %v933, %v939
        %v942 = vsub.f32 %v932, %v940
        %v943 = vsub.f32 %v933, %v941
        %v944 = vmul.f32 %v942, 1.442695
        %v945 = vpow.pop %v944
        %v946 = vmul.f32 %v943, 1.442695
        %v947 = vpow.pop %v946
        %949 = vset.pattern.permute.xlu0 0
        %950 = vperm.xlu0 %949, %v940
        %v951 = vpop.permute.xlu0 %950
        %954 = vset.pattern.permute.xlu0 0
        %955 = vperm.xlu0 %954, %v941
        %v956 = vpop.permute.xlu0 %955
        %v958 = vsub.f32 %v930, %v951
        %v959 = vsub.f32 %v931, %v956
        %v960 = vmul.f32 %v958, 1.442695
        %v961 = vpow.pop %v960
        %v962 = vmul.f32 %v959, 1.442695
        %v963 = vpow.pop %v962
        %v964 = vld [vmem:[#allocation4] sm:$0xff]
        %v965 = vld [vmem:[#allocation4 + $0x8] sm:$0xff]
        %v966 = vmul.f32 %v945, %v964
        %v967 = vmul.f32 %v947, %v965
        %v968 = vsel %vm844, %v961, 0.0
        %969 = vadd.xlane.f32.xlu0 %v968
        %v970 = vpop.xlane.xlu0 %969
        %v971 = vsel %vm844, %v963, 0.0
        %972 = vadd.xlane.f32.xlu0 %v971
        %v973 = vpop.xlane.xlu0 %972
        %v974 = vadd.f32 %v966, %v970
        %v975 = vadd.f32 %v967, %v973
        %vm976 = vcmask 7168
        %977 = vst.msk [vmem:[#allocation4] sm:$0xff] %vm976, %v974
        %978 = vst.msk [vmem:[#allocation4 + $0x8] sm:$0xff] %vm976, %v975
        %v979 = vld [vmem:[#allocation5] sm:$0xff]
        %v980 = vld [vmem:[#allocation5 + $0x8] sm:$0xff]
        %982 = vset.pattern.permute.xlu0 0
        %983 = vperm.xlu0 %982, %v945
        %v984 = vpop.permute.xlu0 %983
        %987 = vset.pattern.permute.xlu0 0
        %988 = vperm.xlu0 %987, %v947
        %v989 = vpop.permute.xlu0 %988
        %v991 = vmul.f32 %v984, %v979
        %v992 = vmul.f32 %v989, %v980
        %v993 = vpack.c.bf16 %v963, %v961
        %v995 = vsel %vm844, %v993, 0
        %vm997 = vcmask 1043456
        %v999 = vsel %vm997, %v836, 0
        %1001 = vmatprep.subr.bf16.mxu0 0
        %1002 = vmatpush1.bf16.msra.mxu0 0
        %1003 = vmatprep.subr.bf16.mxu0 0
        %1004 = vmatpush1.bf16.msra.mxu0 0
        %1005 = vmatprep.subr.bf16.mxu0 0
        %1006 = vmatpush1.bf16.msra.mxu0 0
        %1007 = vmatprep.subr.bf16.mxu0 0
        %1008 = vmatpush1.bf16.msra.mxu0 0
        %1009 = vmatprep.subr.bf16.mxu0 0
        %1010 = vmatpush1.bf16.msra.mxu0 0
        %1011 = vmatprep.subr.bf16.mxu0 0
        %1012 = vmatpush1.bf16.msra.mxu0 0
        %1013 = vmatprep.subr.bf16.mxu0 0
        %1014 = vmatpush1.bf16.msra.mxu0 0
        %1015 = vmatprep.subr.bf16.mxu0 0
        %1016 = vmatpush1.bf16.msra.mxu0 %v999
        %1017 = vmatprep.subr.bf16.mxu0 0
        %1018 = vmatpush2.bf16.msra.mxu0 0
        %1019 = vmatprep.subr.bf16.mxu0 0
        %1020 = vmatpush2.bf16.msra.mxu0 0
        %1021 = vmatprep.subr.bf16.mxu0 0
        %1022 = vmatpush2.bf16.msra.mxu0 0
        %1023 = vmatprep.subr.bf16.mxu0 0
        %1024 = vmatpush2.bf16.msra.mxu0 0
        %1025 = vmatprep.subr.bf16.mxu0 0
        %1026 = vmatpush2.bf16.msra.mxu0 0
        %1027 = vmatprep.subr.bf16.mxu0 0
        %1028 = vmatpush2.bf16.msra.mxu0 0
        %1029 = vmatprep.subr.bf16.mxu0 0
        %1030 = vmatpush2.bf16.msra.mxu0 0
        %1031 = vmatprep.subr.bf16.mxu0 0
        %1032 = vmatpush2.bf16.msra.mxu0 0
        %1033 = vmatprep.mubr.bf16.mxu0 0
        %1034 = vmatmul.mubr.bf16.gmra.mxu0 %v995
        %v1035 = vpop.f32.mrf.mxu0
        %v1036 = vadd.f32 0.0, %v1035
        %v1037 = vpop.f32.mrf.mxu0
        %v1038 = vpop.f32.mrf.mxu0
        %v1039 = vadd.f32 0.0, %v1038
        %v1040 = vpop.f32.mrf.mxu0
        %1041 = vdwg.mxu0
        %v1042 = vadd.f32 %v991, %v1036
        %v1043 = vadd.f32 %v992, %v1039
        %1044 = vst.msk [vmem:[#allocation5] sm:$0xff] %vm844, %v1042
        %1045 = vst.msk [vmem:[#allocation5 + $0x8] sm:$0xff] %vm844, %v1043
        %1046 = vst.msk [vmem:[#allocation3] sm:$0xff] %vm976, %v940
        %1047 = vst.msk [vmem:[#allocation3 + $0x8] sm:$0xff] %vm976, %v941
      $region60: #{transformer_block_forward.5} parent=47 // pred_fallthru
        _
      // Predicated region
      $region61: #{transformer_block_forward.5} parent=47 // pred_check
        %p1048 = pneg %p560
      $region62: #{transformer_block_forward.5} parent=47 // pred_check_branch
        %1050 = sbr.rel (%p1048) target = $region64
      $region63: #{transformer_block_forward.5} parent=47 // pred_region
        %v1051 = vld [vmem:[#allocation5] sm:$0xff]
        %v1052 = vld [vmem:[#allocation5 + $0x8] sm:$0xff]
        %v1053 = vld [vmem:[#allocation4] sm:$0xff]
        %v1054 = vld [vmem:[#allocation4 + $0x8] sm:$0xff]
        %1056 = vset.pattern.permute.xlu0 0
        %1057 = vperm.xlu0 %1056, %v1053
        %v1058 = vpop.permute.xlu0 %1057
        %1061 = vset.pattern.permute.xlu0 0
        %1062 = vperm.xlu0 %1061, %v1054
        %v1063 = vpop.permute.xlu0 %1062
        %v1065 = vrcp.pop %v1058
        %v1066 = vmul.f32 %v1051, %v1065
        %v1067 = vrcp.pop %v1063
        %v1068 = vmul.f32 %v1052, %v1067
        %v1069 = vpack.c.bf16 %v1066, %v1066
        %v1070 = vpack.c.bf16 %v1068, %v1068
        %vm1071 = vcmask 60416
        %1072 = vst.msk [vmem:[%s557] sm:$0xf] %vm1071, %v1069
        %1073 = vst.msk [vmem:[%s557 + $0x4] sm:$0xf] %vm1071, %v1070
      $region64: #{transformer_block_forward.5} parent=47 // pred_fallthru
        _
      %s1074 = smul.u32 2, %s25
      %p1075 = scmp.lt.s32.totalorder %s24, 1
      %s1076 = scalar_select %p1075, %s24, 1
      %p1077 = scmp.lt.s32.totalorder %s1074, 3
      %s1078 = scalar_select %p1077, %s1074, 3
      %p1079 = scmp.lt.s32.totalorder %s26, 0
      %s1080 = scalar_select %p1079, %s26, 0
      %s1081 = sadd.s32 %s1080, %s1078
      %s1082 = smul.addr %s1076, 4
      %s1083 = sadd.s32 %s1081, %s1082
      %s1084 = smul.addr %s1083, 4
      %s1085 = scalar_lea.vmem %s7, %s1084
      // Predicated region
      $region65: #{transformer_block_forward.5} parent=47 // pred_check
        %p1086 = pneg %p276
      $region66: #{transformer_block_forward.5} parent=47 // pred_check_branch
        %1088 = sbr.rel (%p1086) target = $region68
      $region67: #{transformer_block_forward.5} parent=47 // pred_region
        %s1089 = smul.u32 2, %s25
      $region68: #{transformer_block_forward.5} parent=47 // pred_fallthru
        _
    $region48: #{transformer_block_forward.5} parent=5 // pred_fallthru
      _
    %p1090 = scmp.le.s32.totalorder 2, %s13
    // Predicated region
    $region69: #{transformer_block_forward.5} parent=5 // pred_check
      %p1091 = pneg %p1090
    $region70: #{transformer_block_forward.5} parent=5 // pred_check_branch
      %1093 = sbr.rel (%p1091) target = $region72
    $region71: #{transformer_block_forward.5} parent=5 // pred_region
      %s1094 = ssub.s32 %s13, 2
      // Predicated region
      $region73: #{transformer_block_forward.5} parent=71 // pred_check
        %p1095 = pneg %p282
      $region74: #{transformer_block_forward.5} parent=71 // pred_check_branch
        %1097 = sbr.rel (%p1095) target = $region76
      $region75: #{transformer_block_forward.5} parent=71 // pred_region
        %s1098 = smul.u32 2, %s29
        %p1099 = scmp.lt.s32.totalorder %s28, 1
        %s1100 = scalar_select %p1099, %s28, 1
        %p1101 = scmp.lt.s32.totalorder %s1098, 3
        %s1102 = scalar_select %p1101, %s1098, 3
        %p1103 = scmp.lt.s32.totalorder %s30, 0
        %s1104 = scalar_select %p1103, %s30, 0
        %s1105 = sadd.s32 %s1104, %s1102
        %s1106 = smul.addr %s1100, 4
        %s1107 = sadd.s32 %s1105, %s1106
        %s1108 = smul.addr %s1107, 4
        %s1109 = scalar_lea.vmem %s7, %s1108
      $region76: #{transformer_block_forward.5} parent=71 // pred_fallthru
        _
    $region72: #{transformer_block_forward.5} parent=5 // pred_fallthru
      _
  $region6: #{transformer_block_forward.5} parent=0 // loop_footer
    %s17 = sadd.s32 1, %s13
  $region7: #{transformer_block_forward.5} parent=0 // loop_footer_branch
    %12 = sbr.rel target = $region3
  $region8: #{transformer_block_forward.5} parent=0 // loop_exit
    _

</llo_original>
